<compile_context>
chip_gen: v5e
topology: v5e:2x2
jax: 0.10.0
libtpu: 0.0.40
codegen_flags: <defaults>
</compile_context>

<pallas_src>
import jax
import jax.numpy as jnp
from jax.experimental import pallas as pl
from jax.experimental.pallas import tpu as pltpu

_LANE = 128


def _round_up(x, m):
    return (x + m - 1) // m * m


def _is_v5e():
    try:
        kind = jax.devices()[0].device_kind.lower()
        return ("v5 lite" in kind) or ("v5e" in kind) or ("v5litepod" in kind)
    except Exception:
        return False


def _vmem_budget():
    # Generation-aware budget: ~3/4 of physical VMEM (96 MiB on v5e/v6e,
    # 48 MiB on v7x).  Falls back to the most conservative (v7x) figure.
    try:
        cap = pltpu.get_tpu_info().vmem_capacity_bytes
    except Exception:
        cap = 64 * 1024 * 1024
    return int(cap) * 3 // 4


_VMEM_BUDGET = _vmem_budget()
_MXU_N = 128 if _is_v5e() else 256  # MXU column width: 128 on v5e, 256 on v6e/v7x


def _vmem_limit(*block_bytes):
    """Explicit scoped-VMEM limit: double-buffered blocks + headroom."""
    need = 2 * sum(block_bytes) + 4 * 1024 * 1024
    return int(min(max(need, 8 * 1024 * 1024), _VMEM_BUDGET))


def _pad2d(a, rows, cols, dtype):
    r, c = a.shape
    a = a.astype(dtype)
    if (r, c) == (rows, cols):
        return a
    return jnp.zeros((rows, cols), dtype).at[:r, :c].set(a)


def _pad_row(v, cols):
    v = v.astype(jnp.float32).reshape(1, -1)
    if v.shape[1] == cols:
        return v
    return jnp.zeros((1, cols), jnp.float32).at[:, : v.shape[1]].set(v)


# ----------------------------------------------------------------------------
# Fused, tiled matmul kernel:  out = post( pre(X) @ W )
#   pre  : optional per-K  scale/shift (+ReLU)   -- folds a preceding BN+ReLU
#   post : optional per-N scale/shift (+ReLU)    -- folds bias and/or a BN+ReLU
# Prologue / epilogue refs only exist (and are only DMA'd) when used.
# ----------------------------------------------------------------------------
def _make_matmul_kernel(use_prologue, use_epilogue, relu_in, relu_out):
    def kernel(*refs):
        idx = 0
        x_ref = refs[idx]; idx += 1
        w_ref = refs[idx]; idx += 1
        if use_prologue:
            ps_ref, pt_ref = refs[idx], refs[idx + 1]; idx += 2
        if use_epilogue:
            es_ref, et_ref = refs[idx], refs[idx + 1]; idx += 2
        o_ref, acc_ref = refs[idx], refs[idx + 1]

        k = pl.program_id(2)

        @pl.when(k == 0)
        def _():
            acc_ref[...] = jnp.zeros_like(acc_ref)

        x = x_ref[...]
        if use_prologue:
            xf = x.astype(jnp.float32) * ps_ref[...] + pt_ref[...]
            if relu_in:
                xf = jnp.maximum(xf, 0.0)
            x = xf.astype(jnp.bfloat16)
        acc_ref[...] += jnp.dot(x, w_ref[...],
                                preferred_element_type=jnp.float32)

        @pl.when(k == pl.num_programs(2) - 1)
        def _():
            y = acc_ref[...]
            if use_epilogue:
                y = y * es_ref[...] + et_ref[...]
            if relu_out:
                y = jnp.maximum(y, 0.0)
            o_ref[...] = y.astype(o_ref.dtype)

    return kernel


def fused_matmul(x, w, *, bias=None, prologue=None, relu_in=False,
                 epilogue=None, relu_out=False, out_dtype=jnp.bfloat16):
    """(M,K)@(K,N) on the MXU, bf16 inputs, f32 accumulation, fused BN/ReLU."""
    M, K = x.shape
    K2, N = w.shape
    assert K == K2

    use_prologue = prologue is not None
    use_epilogue = (epilogue is not None) or (bias is not None)
    if use_epilogue:
        if epilogue is not None:
            e_scale = epilogue[0].astype(jnp.float32)
            e_shift = epilogue[1].astype(jnp.float32)
        else:
            e_scale = jnp.ones((N,), jnp.float32)
            e_shift = jnp.zeros((N,), jnp.float32)
        if bias is not None:
            # (y + b)*s + t == y*s + (b*s + t)
            e_shift = e_shift + e_scale * bias.astype(jnp.float32)

    # --- tile selection -------------------------------------------------
    # K: pad up so tk is 512 (or the full K when K<=512); padded K rows of W
    # are zero, so padded X columns contribute nothing and we trade a few free
    # FLOPs for far fewer ~0.35us grid steps.
    if K <= 128:
        Kp = 128
    elif K <= 256:
        Kp = 256
    elif K <= 512:
        Kp = 512
    else:
        Kp = _round_up(K, 512)
    tk = min(Kp, 512)

    # N: full MXU width (256 on v6e/v7x, 128 on v5e).
    Np = _round_up(N, _MXU_N)
    tn = _MXU_N

    # M: largest power-of-two tile up to 512 dividing Mp.
    Mp = _round_up(M, _LANE)
    if Mp % 512 == 0:
        tm = 512
    elif Mp % 256 == 0:
        tm = 256
    else:
        tm = 128
    # v7x megacore: keep at least 2 "parallel" tiles when possible.
    if (Mp // tm) * (Np // tn) < 2:
        for cand in (Mp // 2, 256, 128):
            if cand >= 128 and cand % 128 == 0 and Mp % cand == 0 and cand < tm:
                tm = cand
                break

    xp = _pad2d(x, Mp, Kp, jnp.bfloat16)
    wp = _pad2d(w, Kp, Np, jnp.bfloat16)

    operands = [xp, wp]
    in_specs = [
        pl.BlockSpec((tm, tk), lambda i, j, k: (i, k)),
        pl.BlockSpec((tk, tn), lambda i, j, k: (k, j)),
    ]
    if use_prologue:
        operands += [_pad_row(prologue[0], Kp), _pad_row(prologue[1], Kp)]
        in_specs += [pl.BlockSpec((1, tk), lambda i, j, k: (0, k)),
                     pl.BlockSpec((1, tk), lambda i, j, k: (0, k))]
    if use_epilogue:
        operands += [_pad_row(e_scale, Np), _pad_row(e_shift, Np)]
        in_specs += [pl.BlockSpec((1, tn), lambda i, j, k: (0, j)),
                     pl.BlockSpec((1, tn), lambda i, j, k: (0, j))]

    grid = (Mp // tm, Np // tn, Kp // tk)
    kernel = _make_matmul_kernel(use_prologue, use_epilogue, relu_in, relu_out)
    out_itemsize = jnp.dtype(out_dtype).itemsize
    vmem_bytes = _vmem_limit(tm * tk * 2, tk * tn * 2,
                             tm * tn * out_itemsize, tm * tn * 4)

    out = pl.pallas_call(
        kernel,
        out_shape=jax.ShapeDtypeStruct((Mp, Np), out_dtype),
        grid=grid,
        in_specs=in_specs,
        out_specs=pl.BlockSpec((tm, tn), lambda i, j, k: (i, j)),
        scratch_shapes=[pltpu.VMEM((tm, tn), jnp.float32)],
        compiler_params=pltpu.CompilerParams(
            dimension_semantics=("parallel", "parallel", "arbitrary"),
            vmem_limit_bytes=vmem_bytes),
    )(*operands)
    if (Mp, Np) == (M, N):
        return out
    return out[:M, :N]


# ----------------------------------------------------------------------------
# Pooling: separable window reduction (two passes of `ksize` taps each), taps
# reduced INSIDE a Pallas kernel over lane-dense (rows, Wo*C) slabs.  VMEM and
# HBM amplification scale with ksize, not ksize^2.
# ----------------------------------------------------------------------------
def _make_pool_kernel(ntap, op, scale):
    def kernel(*refs):
        o_ref = refs[ntap]
        acc = refs[0][...].astype(jnp.float32)
        for s in range(1, ntap):
            v = refs[s][...].astype(jnp.float32)
            acc = jnp.maximum(acc, v) if op == "max" else acc + v
        if op == "avg":
            acc = acc * scale
        o_ref[...] = acc.astype(o_ref.dtype)
    return kernel


def _reduce_taps_2d(slabs, op, scale):
    """Elementwise-reduce a small list of equal-shape 2D slabs in one call."""
    ntap = len(slabs)
    M, L = slabs[0].shape
    bytes_per_row = L * 2  # bf16
    # Row tile sized from the VMEM budget (double-buffered, ntap inputs + out),
    # multiple of 16 for bf16 sublane packing.
    rows_budget = _VMEM_BUDGET // (2 * (ntap + 1) * bytes_per_row)
    tm = max(16, min(512, rows_budget) // 16 * 16)
    tm = min(tm, _round_up(M, 16))
    Mp = _round_up(M, tm)
    slabs = [_pad2d(s, Mp, L, jnp.bfloat16) for s in slabs]

    kernel = _make_pool_kernel(ntap, op, scale)
    vmem_bytes = _vmem_limit(*([tm * L * 2] * (ntap + 1)))
    out = pl.pallas_call(
        kernel,
        out_shape=jax.ShapeDtypeStruct((Mp, L), jnp.bfloat16),
        grid=(Mp // tm,),
        in_specs=[pl.BlockSpec((tm, L), lambda m: (m, 0)) for _ in range(ntap)],
        out_specs=pl.BlockSpec((tm, L), lambda m: (m, 0)),
        compiler_params=pltpu.CompilerParams(
            dimension_semantics=("parallel",),
            vmem_limit_bytes=vmem_bytes),
    )(*slabs)
    return out[:M] if Mp != M else out


def pool2d_nhwc(x, ksize, stride, pad, op):
    N, H, W, C = x.shape
    pad_val = float("-inf") if op == "max" else 0.0
    xp = (jnp.pad(x, ((0, 0), (pad, pad), (pad, pad), (0, 0)),
                  constant_values=pad_val) if pad else x)
    Hp, Wp = H + 2 * pad, W + 2 * pad
    Ho = (Hp - ksize) // stride + 1
    Wo = (Wp - ksize) // stride + 1
    scale = 1.0 / ksize  # per-pass factor; total 1/ksize^2 for avg

    # pass 1: reduce along W (ksize taps)
    slabs = [xp[:, :, j:j + stride * Wo:stride, :].reshape(N * Hp, Wo * C)
             for j in range(ksize)]
    inter = _reduce_taps_2d(slabs, op, scale).reshape(N, Hp, Wo, C)

    # pass 2: reduce along H (ksize taps)
    slabs = [inter[:, i:i + stride * Ho:stride, :, :].reshape(N * Ho, Wo * C)
             for i in range(ksize)]
    out = _reduce_taps_2d(slabs, op, scale).reshape(N, Ho, Wo, C)
    return out


# ----------------------------------------------------------------------------
# Conv glue: patch extraction only (compute is the fused Pallas matmul)
# ----------------------------------------------------------------------------
def conv2d_nhwc(x, w, stride, pad, *, prologue=None, relu_in=False,
                epilogue=None, relu_out=False):
    """x: (N,H,W,Cin), w: (kh,kw,Cin,Cout), no conv bias (DenseNet convs)."""
    N, H, W_, Cin = x.shape
    kh, kw, _, Cout = w.shape
    if kh == kw == 1 and stride == 1 and pad == 0:
        patches = x.reshape(N * H * W_, Cin)
        Ho, Wo = H, W_
        p_scale_shift = prologue
    else:
        if prologue is not None and pad > 0:
            # TODO(synk): BN prologue + spatial zero padding would wrongly
            # apply shift/ReLU to padded taps; apply BN before padding instead.
            raise NotImplementedError("BN prologue with spatially padded conv")
        # TODO(synk): stream taps inside the matmul kernel (tap as an extra
        # "arbitrary" reduction axis over the HBM-resident padded map) to
        # avoid kh*kw-fold HBM amplification at production sizes.
        xp = jnp.pad(x, ((0, 0), (pad, pad), (pad, pad), (0, 0)))
        Ho = (H + 2 * pad - kh) // stride + 1
        Wo = (W_ + 2 * pad - kw) // stride + 1
        cols = [xp[:, i:i + stride * Ho:stride, j:j + stride * Wo:stride, :]
                for i in range(kh) for j in range(kw)]
        patches = jnp.concatenate(cols, axis=-1).reshape(N * Ho * Wo,
                                                         kh * kw * Cin)
        # per-channel BN prologue replicated per tap (im2col K order = (i,j,Cin))
        p_scale_shift = None
        if prologue is not None:
            p_scale_shift = (jnp.tile(prologue[0], kh * kw),
                             jnp.tile(prologue[1], kh * kw))
    out = fused_matmul(patches, w.reshape(kh * kw * Cin, Cout),
                       prologue=p_scale_shift, relu_in=relu_in,
                       epilogue=epilogue, relu_out=relu_out,
                       out_dtype=jnp.bfloat16)
    return out.reshape(N, Ho, Wo, Cout)


def bn_scale_shift(bn, eps=1e-5):
    scale = bn["gamma"] / jnp.sqrt(bn["var"] + eps)
    shift = bn["beta"] - bn["mean"] * scale
    return scale, shift


# ----------------------------------------------------------------------------
# Deterministic parameter construction
# ----------------------------------------------------------------------------
def _bn_params(key, c):
    k1, k2 = jax.random.split(key)
    return {
        "gamma": 1.0 + 0.1 * jax.random.normal(k1, (c,), jnp.float32),
        "beta": 0.1 * jax.random.normal(k2, (c,), jnp.float32),
        "mean": jnp.zeros((c,), jnp.float32),
        "var": jnp.ones((c,), jnp.float32),
    }


def _conv_w(key, kh, kw, cin, cout):
    fan_in = kh * kw * cin
    return jax.random.normal(key, (kh, kw, cin, cout), jnp.float32) / jnp.sqrt(fan_in)


def build_params(key, *, in_ch=3, init_feat=64, growth=32, bn_size=4,
                 num_layers=2, flat_dim=None, num_classes=149):
    keys = jax.random.split(key, 64)
    ki = iter(range(64))
    p = {}
    # stem: conv7x7/2 -> BN -> ReLU -> maxpool3x3/2
    p["conv0"] = _conv_w(keys[next(ki)], 7, 7, in_ch, init_feat)
    p["norm0"] = _bn_params(keys[next(ki)], init_feat)
    # one dense block
    ch = init_feat
    layers = []
    for _ in range(num_layers):
        layers.append({
            "norm1": _bn_params(keys[next(ki)], ch),
            "conv1": _conv_w(keys[next(ki)], 1, 1, ch, bn_size * growth),
            "norm2": _bn_params(keys[next(ki)], bn_size * growth),
            "conv2": _conv_w(keys[next(ki)], 3, 3, bn_size * growth, growth),
        })
        ch += growth
    p["block1"] = layers
    # transition: BN -> ReLU -> conv1x1 (halve) -> avgpool2x2
    tr_out = ch // 2
    p["trans"] = {"norm": _bn_params(keys[next(ki)], ch),
                  "conv": _conv_w(keys[next(ki)], 1, 1, ch, tr_out)}
    # final feature BN (densenet norm5)
    p["norm5"] = _bn_params(keys[next(ki)], tr_out)
    # linear head (analog of nn.Linear(108192, 149))
    p["lin_w"] = jax.random.normal(keys[next(ki)], (flat_dim, num_classes),
                                   jnp.float32) / jnp.sqrt(flat_dim)
    p["lin_b"] = 0.01 * jax.random.normal(keys[next(ki)], (num_classes,),
                                          jnp.float32)
    return p


# ----------------------------------------------------------------------------
# Forward pass (mirrors CNN.forward: features(x) -> flatten -> linear)
# ----------------------------------------------------------------------------
def cnn_forward(params, x_nchw):
    x = jnp.transpose(x_nchw, (0, 2, 3, 1)).astype(jnp.bfloat16)  # NCHW -> NHWC
    # --- features ---
    # stem: conv7x7/2 with fused BN(norm0)+ReLU epilogue, then maxpool3x3/2
    s0, t0 = bn_scale_shift(params["norm0"])
    x = conv2d_nhwc(x, params["conv0"], 2, 3, epilogue=(s0, t0), relu_out=True)
    x = pool2d_nhwc(x, ksize=3, stride=2, pad=1, op="max")
    # dense block: each layer's BN1+ReLU -> conv1x1 -> BN2+ReLU is ONE matmul
    for lyr in params["block1"]:
        s1, t1 = bn_scale_shift(lyr["norm1"])
        s2, t2 = bn_scale_shift(lyr["norm2"])
        h = conv2d_nhwc(x, lyr["conv1"], 1, 0,
                        prologue=(s1, t1), relu_in=True,
                        epilogue=(s2, t2), relu_out=True)
        h = conv2d_nhwc(h, lyr["conv2"], 1, 1)         # 3x3 growth conv
        # TODO(synk): write conv2's output directly into a preallocated
        # channel slice via out_spec offset + input_output_aliases to avoid
        # the concat re-copy at production widths.
        x = jnp.concatenate([x, h], axis=-1)           # DenseNet concat
    # transition: BN+ReLU fused as prologue of the 1x1 conv, then avgpool2x2
    st, tt = bn_scale_shift(params["trans"]["norm"])
    t = conv2d_nhwc(x, params["trans"]["conv"], 1, 0,
                    prologue=(st, tt), relu_in=True)
    t = pool2d_nhwc(t, ksize=2, stride=2, pad=0, op="avg")
    # --- classifier head ---
    # norm5 has NO ReLU before the linear, so fold it into the weights/bias:
    #   (x*s + t) @ W + b == x @ (s[:,None]*W) + (t @ W + b)
    # leaving the big head matmul a pure MXU matmul with a bias epilogue.
    Nb, Hf, Wf, Cf = t.shape
    s5, t5 = bn_scale_shift(params["norm5"])
    flat = jnp.transpose(t, (0, 3, 1, 2)).reshape(Nb, Cf * Hf * Wf)  # NCHW flatten
    p_scale = jnp.repeat(s5, Hf * Wf)                  # flat index = c*Hf*Wf + ...
    p_shift = jnp.repeat(t5, Hf * Wf)
    w = params["lin_w"].astype(jnp.float32)
    w_folded = w * p_scale[:, None]
    b_folded = params["lin_b"].astype(jnp.float32) + p_shift @ w
    return fused_matmul(flat, w_folded, bias=b_folded, out_dtype=jnp.float32)


# ----------------------------------------------------------------------------
if __name__ == "__main__":
    key = jax.random.PRNGKey(0)
    k_x, k_p = jax.random.split(key)

    N, C, H, W = 2, 3, 32, 32                      # small RGB-like NCHW input
    x = jax.random.normal(k_x, (N, C, H, W), jnp.float32)

    # feature pipeline: 32 --conv/2--> 16 --maxpool/2--> 8 --avgpool/2--> 4
    init_feat, growth, num_layers = 64, 32, 2      # lane-friendly channel counts
    final_ch = (init_feat + num_layers * growth) // 2          # 64
    flat_dim = final_ch * 4 * 4                                # 1024

    params = build_params(k_p, in_ch=C, init_feat=init_feat, growth=growth,
                          bn_size=4, num_layers=num_layers,
                          flat_dim=flat_dim, num_classes=149)

    out = jax.block_until_ready(cnn_forward(params, x))
    assert out.shape == (N, 149), out.shape
    assert bool(jnp.all(jnp.isfinite(out)))
    print("KERNEL_OK")
</pallas_src>

<mosaic_0001>
module attributes {stable_mosaic.version = 11 : i64} {
  func.func @kernel(%arg0: i32, %arg1: i32, %arg2: i32, %arg3: memref<256x256xbf16, #tpu.memory_space<vmem>>, %arg4: memref<256x256xbf16, #tpu.memory_space<vmem>>, %arg5: memref<1x256xf32, #tpu.memory_space<vmem>>, %arg6: memref<1x256xf32, #tpu.memory_space<vmem>>, %arg7: memref<256x256xbf16, #tpu.memory_space<vmem>>, %arg8: memref<256x256xf32, #tpu.memory_space<vmem>>) attributes {dimension_semantics = [#tpu.dimension_semantics<parallel>, #tpu.dimension_semantics<parallel>, #tpu.dimension_semantics<arbitrary>], iteration_bounds = array<i64: 2, 1, 1>, scalar_prefetch = 0 : i64, scratch_operands = 1 : i64, tpu.core_type = #tpu.core_type<tc>, window_params = [{transform_indices = @transform_0, window_bounds = array<i64: 256, 256>}, {transform_indices = @transform_1, window_bounds = array<i64: 256, 256>}, {transform_indices = @transform_2, window_bounds = array<i64: 1, 256>}, {transform_indices = @transform_3, window_bounds = array<i64: 1, 256>}, {transform_indices = @transform_4, window_bounds = array<i64: 256, 256>}]} {
    %c0_i32 = arith.constant 0 : i32
    %0 = arith.cmpi eq, %arg2, %c0_i32 : i32
    %1 = arith.extui %0 : i1 to i32
    %c0_i32_0 = arith.constant 0 : i32
    %2 = arith.cmpi ne, %1, %c0_i32_0 : i32
    scf.if %2 {
      %cst_10 = arith.constant 0.000000e+00 : f32
      %12 = vector.broadcast %cst_10 : f32 to vector<256x256xf32>
      %c0_11 = arith.constant 0 : index
      %c0_12 = arith.constant 0 : index
      %13 = vector.load %arg8[%c0_11, %c0_12] : memref<256x256xf32, #tpu.memory_space<vmem>>, vector<256x256xf32>
      tpu.vector_store %arg8[%c0_11, %c0_12], %12 {strides = array<i32>} : memref<256x256xf32, #tpu.memory_space<vmem>>, vector<256x256xf32>,
    } else {
    }
    %c0 = arith.constant 0 : index
    %c0_1 = arith.constant 0 : index
    %3 = vector.load %arg3[%c0, %c0_1] : memref<256x256xbf16, #tpu.memory_space<vmem>>, vector<256x256xbf16>
    %c0_2 = arith.constant 0 : index
    %c0_3 = arith.constant 0 : index
    %4 = vector.load %arg8[%c0_2, %c0_3] : memref<256x256xf32, #tpu.memory_space<vmem>>, vector<256x256xf32>
    %c0_4 = arith.constant 0 : index
    %c0_5 = arith.constant 0 : index
    %5 = vector.load %arg4[%c0_4, %c0_5] : memref<256x256xbf16, #tpu.memory_space<vmem>>, vector<256x256xbf16>
    %cst = arith.constant dense<0.000000e+00> : vector<256x256xf32>
    %6 = tpu.matmul %3, %5, %cst {dimension_numbers = #tpu.dot_dimension_numbers<[1], [0], [0], [1], [0, 0, 1, 1], [], []>} : vector<256x256xbf16>, vector<256x256xbf16>, vector<256x256xf32> -> vector<256x256xf32>
    %7 = arith.addf %4, %6 : vector<256x256xf32>
    %c0_6 = arith.constant 0 : index
    %c0_7 = arith.constant 0 : index
    %8 = vector.load %arg8[%c0_6, %c0_7] : memref<256x256xf32, #tpu.memory_space<vmem>>, vector<256x256xf32>
    tpu.vector_store %arg8[%c0_6, %c0_7], %7 {strides = array<i32>} : memref<256x256xf32, #tpu.memory_space<vmem>>, vector<256x256xf32>,
    %c0_i32_8 = arith.constant 0 : i32
    %9 = arith.cmpi eq, %arg2, %c0_i32_8 : i32
    %10 = arith.extui %9 : i1 to i32
    %c0_i32_9 = arith.constant 0 : i32
    %11 = arith.cmpi ne, %10, %c0_i32_9 : i32
    scf.if %11 {
      %c0_10 = arith.constant 0 : index
      %c0_11 = arith.constant 0 : index
      %12 = vector.load %arg8[%c0_10, %c0_11] : memref<256x256xf32, #tpu.memory_space<vmem>>, vector<256x256xf32>
      %c0_12 = arith.constant 0 : index
      %c0_13 = arith.constant 0 : index
      %13 = vector.load %arg5[%c0_12, %c0_13] : memref<1x256xf32, #tpu.memory_space<vmem>>, vector<1x256xf32>
      %14 = vector.broadcast %13 : vector<1x256xf32> to vector<256x256xf32>
      %15 = arith.mulf %12, %14 : vector<256x256xf32>
      %c0_14 = arith.constant 0 : index
      %c0_15 = arith.constant 0 : index
      %16 = vector.load %arg6[%c0_14, %c0_15] : memref<1x256xf32, #tpu.memory_space<vmem>>, vector<1x256xf32>
      %17 = vector.broadcast %16 : vector<1x256xf32> to vector<256x256xf32>
      %18 = arith.addf %15, %17 : vector<256x256xf32>
      %cst_16 = arith.constant 0.000000e+00 : f32
      %19 = vector.broadcast %cst_16 : f32 to vector<256x256xf32>
      %20 = arith.maximumf %18, %19 : vector<256x256xf32>
      %21 = arith.truncf %20 : vector<256x256xf32> to vector<256x256xbf16>
      %c0_17 = arith.constant 0 : index
      %c0_18 = arith.constant 0 : index
      %22 = vector.load %arg7[%c0_17, %c0_18] : memref<256x256xbf16, #tpu.memory_space<vmem>>, vector<256x256xbf16>
      tpu.vector_store %arg7[%c0_17, %c0_18], %21 {strides = array<i32>} : memref<256x256xbf16, #tpu.memory_space<vmem>>, vector<256x256xbf16>,
    } else {
    }
    return
  }
  func.func @transform_0(%arg0: i32, %arg1: i32, %arg2: i32) -> (i32, i32) {
    %c0_i32 = arith.constant 0 : i32
    return %arg0, %arg2 : i32, i32
  }
  func.func @transform_1(%arg0: i32, %arg1: i32, %arg2: i32) -> (i32, i32) {
    %c0_i32 = arith.constant 0 : i32
    return %arg2, %arg1 : i32, i32
  }
  func.func @transform_2(%arg0: i32, %arg1: i32, %arg2: i32) -> (i32, i32) {
    %c0_i32 = arith.constant 0 : i32
    %c0_i32_0 = arith.constant 0 : i32
    return %c0_i32, %arg1 : i32, i32
  }
  func.func @transform_3(%arg0: i32, %arg1: i32, %arg2: i32) -> (i32, i32) {
    %c0_i32 = arith.constant 0 : i32
    %c0_i32_0 = arith.constant 0 : i32
    return %c0_i32, %arg1 : i32, i32
  }
  func.func @transform_4(%arg0: i32, %arg1: i32, %arg2: i32) -> (i32, i32) {
    %c0_i32 = arith.constant 0 : i32
    return %arg0, %arg1 : i32, i32
  }
}

</mosaic_0001>

<llo_original>
// kernel: tpu_custom_call.1
$region0: #{tpu_custom_call.1}
  #allocation0 [shape = 'u32[]', space=smem, size = 0x4, offset = 0x4, fixed_abs, tag = 'smem constant byte address 0x4 - core index']
  #allocation1 [shape = 'u32[72,128]{1,0:T(1,128)}', space=vmem, size = 0x9000, scoped, tag = 'internal scratch']
  #allocation2 [shape = 'f32[256,256]{1,0:T(8,128)}', space=vmem, size = 0x40000, scoped, tag = 'scratch operand']
  %s0 = inlined_call_operand.hbm [shape: bf16[512,256], index: 0, kind: input, shape index: {}]
  %s1 = inlined_call_operand.hbm [shape: bf16[256,256], index: 1, kind: input, shape index: {}]
  %s2 = inlined_call_operand.hbm [shape: f32[1,256], index: 2, kind: input, shape index: {}]
  %s3 = inlined_call_operand.vmem [shape: f32[1,256], index: 3, kind: input, shape index: {}]
  %s4 = inlined_call_operand.hbm [shape: bf16[512,256], index: 4, kind: output, shape index: {}]
  %s5 = sld [smem:[#allocation0]]
  $region69: #{tpu_custom_call.1} parent=0
    _
  %s7 = ssub.s32 1, %s5
  %s8 = scalar_select 0, %s7, %s5
  $region1: #{tpu_custom_call.1} parent=0
    #allocation3 [shape = 'u8[262144]{0}', space=vmem, size = 0x40000, scoped, tag = 'input window, operand 0']
    #allocation4 [shape = 's32[2]{0}', space=sflag, size = 0x8, scoped, tag = 'scoped memory for tpu_custom_call.1']
    #allocation5 [shape = 's32[2]{0}', space=sflag, size = 0x8, scoped, tag = 'scoped memory for tpu_custom_call.1']
    #allocation6 [shape = 'u8[131072]{0}', space=vmem, size = 0x20000, scoped, tag = 'input window, operand 1, single buffered']
    #allocation7 [shape = 's32[1]{0}', space=sflag, size = 0x4, scoped, tag = 'scoped memory for tpu_custom_call.1']
    #allocation8 [shape = 'u8[1024]{0}', space=vmem, size = 0x400, scoped, tag = 'input window, operand 2, single buffered']
    #allocation9 [shape = 'u8[262144]{0}', space=vmem, size = 0x40000, scoped, tag = 'output window, operand 0']
    %9 = vsyncpa [#allocation4], 0
    %s10 = scalar_lea.sflag [#allocation4], 1
    %11 = vsyncpa %s10, 0
    %12 = vsyncpa [#allocation7], 0
    %13 = vsyncpa [#allocation5], 0
    %s14 = scalar_lea.sflag [#allocation5], 1
    %15 = vsyncpa %s14, 0
    loop: start=0, step=1, limit=4
    $region2: #{tpu_custom_call.1} parent=1 // loop_pre_header
      _
    $region3: #{tpu_custom_call.1} parent=1 // loop_header
      %s17 = sphi 0, %s21
      %p18 = scmp.ge.s32.totalorder %s17, 4
      %s24 = sphi 0, %s43
      %s25 = sphi 0, %s39
      %s26 = sphi 0, %s35
      %s27 = sphi 0, %s24
      %s28 = sphi 0, %s25
      %s29 = sphi 0, %s26
      %s30 = sphi 0, %s27
      %s31 = sphi 0, %s28
      %s32 = sphi 0, %s29
      %s48 = sphi 0, %s50
      %s51 = sphi 0, %s48
      %s52 = sphi 0, %s51
      %s68 = sphi 0, %s52
      %s76 = sphi 0, %s78
      %s79 = sphi 0, %s76
      %s80 = sphi 0, %s79
      %s96 = sphi 0, %s80
      %s102 = sphi 0, %s104
      %s105 = sphi 0, %s102
      %s106 = sphi 0, %s105
      %s122 = sphi 0, %s106
      %s128 = sphi 0, %s130
      %s131 = sphi 0, %s128
      %s132 = sphi 0, %s131
      %s148 = sphi 0, %s132
      %s156 = sphi 0, %s158
      %s159 = sphi 0, %s156
      %s160 = sphi 0, %s159
      %s176 = sphi 0, %s160
    $region4: #{tpu_custom_call.1} parent=1 // loop_header_branch
      %20 = sbr.rel (%p18) target = $region8
    $region5: #{tpu_custom_call.1} parent=1 // loop_body
      %s22 = ssub.s32 %s17, 1
      %s23 = ssub.s32 %s17, 2
      %s33 = sadd.s32 1, %s26
      %p34 = scmp.ge.s32.totalorder %s33, 1
      %s35 = scalar_select %p34, 0, %s33
      %s36 = sadd.s32 1, %s25
      %s37 = scalar_select %p34, %s36, %s25
      %p38 = scmp.ge.s32.totalorder %s37, 1
      %s39 = scalar_select %p38, 0, %s37
      %s40 = sadd.s32 1, %s24
      %s41 = scalar_select %p38, %s40, %s24
      %p42 = scmp.ge.s32.totalorder %s41, 2
      %s43 = scalar_select %p42, 0, %s41
      %s44 = ssub.s32 %s24, %s43
      %s45 = ssub.s32 %s26, %s35
      %s46 = sor.u32 %s44, %s45
      %p47 = scmp.eq.s32.totalorder %s46, 0
      %s49 = sadd.s32 %s48, 1
      %s50 = scalar_select %p47, %s48, %s49
      %p53 = pneg %p47
      %p54 = scmp.eq.s32.totalorder %s17, 1
      %p55 = por %p53, %p54
      %p56 = scmp.ne.s32.totalorder %s48, %s51
      %p57 = scmp.eq.s32.totalorder %s17, 0
      %p58 = por %p56, %p57
      %p59 = scmp.ne.s32.totalorder %s48, %s51
      %p60 = scmp.eq.s32.totalorder %s22, 1
      %p61 = por %p59, %p60
      %p62 = scmp.ne.s32.totalorder %s51, %s52
      %p63 = scmp.eq.s32.totalorder %s22, 0
      %p64 = por %p62, %p63
      %p65 = scmp.ne.s32.totalorder %s51, %s52
      %p66 = scmp.eq.s32.totalorder %s23, 1
      %p67 = por %p65, %p66
      %p69 = scmp.ne.s32.totalorder %s52, %s68
      %p70 = scmp.eq.s32.totalorder %s23, 0
      %p71 = por %p69, %p70
      %s72 = ssub.s32 %s26, %s35
      %s73 = ssub.s32 %s25, %s39
      %s74 = sor.u32 %s72, %s73
      %p75 = scmp.eq.s32.totalorder %s74, 0
      %s77 = sadd.s32 %s76, 1
      %s78 = scalar_select %p75, %s76, %s77
      %p81 = pneg %p75
      %p82 = scmp.eq.s32.totalorder %s17, 1
      %p83 = por %p81, %p82
      %p84 = scmp.ne.s32.totalorder %s76, %s79
      %p85 = scmp.eq.s32.totalorder %s17, 0
      %p86 = por %p84, %p85
      %p87 = scmp.ne.s32.totalorder %s76, %s79
      %p88 = scmp.eq.s32.totalorder %s22, 1
      %p89 = por %p87, %p88
      %p90 = scmp.ne.s32.totalorder %s79, %s80
      %p91 = scmp.eq.s32.totalorder %s22, 0
      %p92 = por %p90, %p91
      %p93 = scmp.ne.s32.totalorder %s79, %s80
      %p94 = scmp.eq.s32.totalorder %s23, 1
      %p95 = por %p93, %p94
      %p97 = scmp.ne.s32.totalorder %s80, %s96
      %p98 = scmp.eq.s32.totalorder %s23, 0
      %p99 = por %p97, %p98
      %s100 = ssub.s32 %s25, %s39
      %p101 = scmp.eq.s32.totalorder %s100, 0
      %s103 = sadd.s32 %s102, 1
      %s104 = scalar_select %p101, %s102, %s103
      %p107 = pneg %p101
      %p108 = scmp.eq.s32.totalorder %s17, 1
      %p109 = por %p107, %p108
      %p110 = scmp.ne.s32.totalorder %s102, %s105
      %p111 = scmp.eq.s32.totalorder %s17, 0
      %p112 = por %p110, %p111
      %p113 = scmp.ne.s32.totalorder %s102, %s105
      %p114 = scmp.eq.s32.totalorder %s22, 1
      %p115 = por %p113, %p114
      %p116 = scmp.ne.s32.totalorder %s105, %s106
      %p117 = scmp.eq.s32.totalorder %s22, 0
      %p118 = por %p116, %p117
      %p119 = scmp.ne.s32.totalorder %s105, %s106
      %p120 = scmp.eq.s32.totalorder %s23, 1
      %p121 = por %p119, %p120
      %p123 = scmp.ne.s32.totalorder %s106, %s122
      %p124 = scmp.eq.s32.totalorder %s23, 0
      %p125 = por %p123, %p124
      %s126 = ssub.s32 %s25, %s39
      %p127 = scmp.eq.s32.totalorder %s126, 0
      %s129 = sadd.s32 %s128, 1
      %s130 = scalar_select %p127, %s128, %s129
      %p133 = pneg %p127
      %p134 = scmp.eq.s32.totalorder %s17, 1
      %p135 = por %p133, %p134
      %p136 = scmp.ne.s32.totalorder %s128, %s131
      %p137 = scmp.eq.s32.totalorder %s17, 0
      %p138 = por %p136, %p137
      %p139 = scmp.ne.s32.totalorder %s128, %s131
      %p140 = scmp.eq.s32.totalorder %s22, 1
      %p141 = por %p139, %p140
      %p142 = scmp.ne.s32.totalorder %s131, %s132
      %p143 = scmp.eq.s32.totalorder %s22, 0
      %p144 = por %p142, %p143
      %p145 = scmp.ne.s32.totalorder %s131, %s132
      %p146 = scmp.eq.s32.totalorder %s23, 1
      %p147 = por %p145, %p146
      %p149 = scmp.ne.s32.totalorder %s132, %s148
      %p150 = scmp.eq.s32.totalorder %s23, 0
      %p151 = por %p149, %p150
      %s152 = ssub.s32 %s24, %s43
      %s153 = ssub.s32 %s25, %s39
      %s154 = sor.u32 %s152, %s153
      %p155 = scmp.eq.s32.totalorder %s154, 0
      %s157 = sadd.s32 %s156, 1
      %s158 = scalar_select %p155, %s156, %s157
      %p161 = pneg %p155
      %p162 = scmp.eq.s32.totalorder %s17, 1
      %p163 = por %p161, %p162
      %p164 = scmp.ne.s32.totalorder %s156, %s159
      %p165 = scmp.eq.s32.totalorder %s17, 0
      %p166 = por %p164, %p165
      %p167 = scmp.ne.s32.totalorder %s156, %s159
      %p168 = scmp.eq.s32.totalorder %s22, 1
      %p169 = por %p167, %p168
      %p170 = scmp.ne.s32.totalorder %s159, %s160
      %p171 = scmp.eq.s32.totalorder %s22, 0
      %p172 = por %p170, %p171
      %p173 = scmp.ne.s32.totalorder %s159, %s160
      %p174 = scmp.eq.s32.totalorder %s23, 1
      %p175 = por %p173, %p174
      %p177 = scmp.ne.s32.totalorder %s160, %s176
      %p178 = scmp.eq.s32.totalorder %s23, 0
      %p179 = por %p177, %p178
      %p180 = scmp.le.s32.totalorder 1, %s17
      %p181 = scmp.lt.s32.totalorder %s17, 3
      %p182 = pnand %p180, %p181
      %p183 = pneg %p182
      // Predicated region
      $region9: #{tpu_custom_call.1} parent=5 // pred_check
        _
      $region10: #{tpu_custom_call.1} parent=5 // pred_check_branch
        %185 = sbr.rel (%p182) target = $region12
      $region11: #{tpu_custom_call.1} parent=5 // pred_region
        %s186 = ssub.s32 %s17, 1
        // Predicated region
        $region13: #{tpu_custom_call.1} parent=11 // pred_check
          %p187 = pneg %p92
        $region14: #{tpu_custom_call.1} parent=11 // pred_check_branch
          %189 = sbr.rel (%p187) target = $region16
        $region15: #{tpu_custom_call.1} parent=11 // pred_region
          %s190 = smul.u32 32, %s29
          %s191 = smul.u32 2, %s28
          %193 = vsyncadd [#allocation7], 0
          %s194 = smul.addr %s190, 2
          %s195 = sadd.s32 %s191, %s194
          %s196 = smul.addr %s195, 4
          %s197 = scalar_lea.hbm %s1, %s196
          %s198 = sshll.u32 %s197, 4
          %s199 = int_to_ptr.hbm [resolvable:$true] %s198
          %s200 = sshll.u32 [#allocation6], 4
          %s201 = int_to_ptr.vmem [resolvable:$true] %s200
          %206 = dma.hbm_to_vmem [thread:$0]  %s199, 4096, %s201, [#allocation7], 128, 128, 8
        $region16: #{tpu_custom_call.1} parent=11 // pred_fallthru
          _
        // Predicated region
        $region17: #{tpu_custom_call.1} parent=11 // pred_check
          %p207 = pneg %p118
        $region18: #{tpu_custom_call.1} parent=11 // pred_check_branch
          %209 = sbr.rel (%p207) target = $region20
        $region19: #{tpu_custom_call.1} parent=11 // pred_region
          %s210 = smul.u32 2, %s28
          %212 = vsyncadd [#allocation7], 0
          %s213 = scalar_lea.hbm %s2, %s210
          %s215 = sshll.u32 %s213, 4
          %s216 = int_to_ptr.hbm [resolvable:$true] %s215
          %s217 = sshll.u32 [#allocation8], 4
          %s218 = int_to_ptr.vmem [resolvable:$true] %s217
          %220 = dma.hbm_to_vmem [thread:$0]  %s216, 32, %s218, [#allocation7]
        $region20: #{tpu_custom_call.1} parent=11 // pred_fallthru
          _
        // Predicated region
        $region21: #{tpu_custom_call.1} parent=11 // pred_check
          %p221 = pneg %p144
        $region22: #{tpu_custom_call.1} parent=11 // pred_check_branch
          %223 = sbr.rel (%p221) target = $region24
        $region23: #{tpu_custom_call.1} parent=11 // pred_region
          %s224 = smul.u32 2, %s28
          %p225 = scmp.lt.s32.totalorder %s224, 1
          %s226 = scalar_select %p225, %s224, 1
          %s227 = scalar_lea.vmem %s3, %s226
          %s228 = smul.u32 2, %s28
        $region24: #{tpu_custom_call.1} parent=11 // pred_fallthru
          _
      $region12: #{tpu_custom_call.1} parent=5 // pred_fallthru
        _
      %p229 = scmp.lt.s32.totalorder %s17, 2
      // Predicated region
      $region25: #{tpu_custom_call.1} parent=5 // pred_check
        %p230 = pneg %p229
      $region26: #{tpu_custom_call.1} parent=5 // pred_check_branch
        %232 = sbr.rel (%p230) target = $region28
      $region27: #{tpu_custom_call.1} parent=5 // pred_region
        // Predicated region
        $region29: #{tpu_custom_call.1} parent=27 // pred_check
          %p233 = pneg %p58
        $region30: #{tpu_custom_call.1} parent=27 // pred_check_branch
          %235 = sbr.rel (%p233) target = $region32
        $region31: #{tpu_custom_call.1} parent=27 // pred_region
          %s236 = sand.u32 %s48, 1
          %s237 = scalar_lea.sflag [#allocation4], %s236
          %s238 = sand.u32 %s48, 1
          %s239 = smul.addr %s238, 256
          %s240 = scalar_lea.vmem [#allocation3], %s239
          %s241 = smul.u32 32, %s24
          %s242 = smul.u32 2, %s26
          %244 = vsyncadd %s237, 0
          %s245 = smul.addr %s241, 2
          %s246 = sadd.s32 %s242, %s245
          %s247 = smul.addr %s246, 4
          %s248 = scalar_lea.hbm %s0, %s247
          %s249 = sshll.u32 %s248, 4
          %s250 = int_to_ptr.hbm [resolvable:$true] %s249
          %s251 = sshll.u32 %s240, 4
          %s252 = int_to_ptr.vmem [resolvable:$true] %s251
          %257 = dma.hbm_to_vmem [thread:$0]  %s250, 4096, %s252, %s237, 128, 128, 8
        $region32: #{tpu_custom_call.1} parent=27 // pred_fallthru
          _
      $region28: #{tpu_custom_call.1} parent=5 // pred_fallthru
        _
      %p258 = scmp.le.s32.totalorder 1, %s17
      %p259 = scmp.lt.s32.totalorder %s17, 3
      %p260 = pnand %p258, %p259
      %p261 = pneg %p260
      // Predicated region
      $region33: #{tpu_custom_call.1} parent=5 // pred_check
        _
      $region34: #{tpu_custom_call.1} parent=5 // pred_check_branch
        %263 = sbr.rel (%p260) target = $region36
      $region35: #{tpu_custom_call.1} parent=5 // pred_region
        %s264 = ssub.s32 %s17, 1
        %s265 = sand.u32 %s51, 1
        %s266 = scalar_lea.sflag [#allocation4], %s265
        %s267 = sand.u32 %s51, 1
        %s268 = smul.addr %s267, 256
        %s269 = scalar_lea.vmem [#allocation3], %s268
        // Predicated region
        $region37: #{tpu_custom_call.1} parent=35 // pred_check
          %p270 = pneg %p64
        $region38: #{tpu_custom_call.1} parent=35 // pred_check_branch
          %272 = sbr.rel (%p270) target = $region40
        $region39: #{tpu_custom_call.1} parent=35 // pred_region
          %274 = dma.done %s266, 4096
        $region40: #{tpu_custom_call.1} parent=35 // pred_fallthru
          _
        // Predicated region
        $region41: #{tpu_custom_call.1} parent=35 // pred_check
          %p275 = pneg %p92
        $region42: #{tpu_custom_call.1} parent=35 // pred_check_branch
          %277 = sbr.rel (%p275) target = $region44
        $region43: #{tpu_custom_call.1} parent=35 // pred_region
          %279 = dma.done [#allocation7], 4096
        $region44: #{tpu_custom_call.1} parent=35 // pred_fallthru
          _
        // Predicated region
        $region45: #{tpu_custom_call.1} parent=35 // pred_check
          %p280 = pneg %p118
        $region46: #{tpu_custom_call.1} parent=35 // pred_check_branch
          %282 = sbr.rel (%p280) target = $region48
        $region47: #{tpu_custom_call.1} parent=35 // pred_region
          %284 = dma.done [#allocation7], 32
        $region48: #{tpu_custom_call.1} parent=35 // pred_fallthru
          _
        %s285 = sand.u32 %s51, 1
        %s286 = scalar_lea.sflag [#allocation4], %s285
        %s287 = sand.u32 %s51, 1
        %s288 = smul.addr %s287, 256
        %s289 = scalar_lea.vmem [#allocation3], %s288
        %p290 = pneg %p64
        %p291 = pneg %p61
        %p292 = pneg %p92
        %p293 = pneg %p89
        %p294 = pneg %p118
        %p295 = pneg %p115
        %s296 = smul.u32 2, %s28
        %p297 = scmp.lt.s32.totalorder %s296, 1
        %s298 = scalar_select %p297, %s296, 1
        %s299 = scalar_lea.vmem %s3, %s298
        %p300 = pneg %p144
        %p301 = pneg %p141
        %p302 = pneg %p172
        %p303 = pneg %p169
        %s304 = sand.u32 %s159, 1
        %s305 = scalar_lea.sflag [#allocation5], %s304
        %s306 = sand.u32 %s159, 1
        %s307 = smul.addr %s306, 256
        %s308 = scalar_lea.vmem [#allocation9], %s307
        %s309 = smul.u32 32, %s27
        %s310 = smul.u32 2, %s29
        %s311 = smul.u32 32, %s29
        %s312 = smul.u32 2, %s28
        %s313 = smul.u32 2, %s28
        %s314 = smul.u32 2, %s28
        %p315 = scmp.lt.s32.totalorder %s314, 1
        %s316 = scalar_select %p315, %s314, 1
        %s317 = scalar_lea.vmem %s3, %s316
        %s318 = smul.u32 2, %s28
        %s319 = smul.u32 32, %s27
        %s320 = smul.u32 2, %s28
        %p321 = scmp.eq.s32.totalorder %s29, 0
        // Predicated region
        $region49: #{tpu_custom_call.1} parent=35 // pred_check
          %p322 = pneg %p321
        $region50: #{tpu_custom_call.1} parent=35 // pred_check_branch
          %324 = sbr.rel (%p322) target = $region52
        $region51: #{tpu_custom_call.1} parent=35 // pred_region
          %325 = vst [vmem:[#allocation2] sm:$0xff] 0.0
          %326 = vst [vmem:[#allocation2 + $0x8] sm:$0xff] 0.0
          %327 = vst [vmem:[#allocation2 + $0x10] sm:$0xff] 0.0
          %328 = vst [vmem:[#allocation2 + $0x18] sm:$0xff] 0.0
          %329 = vst [vmem:[#allocation2 + $0x20] sm:$0xff] 0.0
          %330 = vst [vmem:[#allocation2 + $0x28] sm:$0xff] 0.0
          %331 = vst [vmem:[#allocation2 + $0x30] sm:$0xff] 0.0
          %332 = vst [vmem:[#allocation2 + $0x38] sm:$0xff] 0.0
          %333 = vst [vmem:[#allocation2 + $0x40] sm:$0xff] 0.0
          %334 = vst [vmem:[#allocation2 + $0x48] sm:$0xff] 0.0
          %335 = vst [vmem:[#allocation2 + $0x50] sm:$0xff] 0.0
          %336 = vst [vmem:[#allocation2 + $0x58] sm:$0xff] 0.0
          %337 = vst [vmem:[#allocation2 + $0x60] sm:$0xff] 0.0
          %338 = vst [vmem:[#allocation2 + $0x68] sm:$0xff] 0.0
          %339 = vst [vmem:[#allocation2 + $0x70] sm:$0xff] 0.0
          %340 = vst [vmem:[#allocation2 + $0x78] sm:$0xff] 0.0
          %341 = vst [vmem:[#allocation2 + $0x80] sm:$0xff] 0.0
          %342 = vst [vmem:[#allocation2 + $0x88] sm:$0xff] 0.0
          %343 = vst [vmem:[#allocation2 + $0x90] sm:$0xff] 0.0
          %344 = vst [vmem:[#allocation2 + $0x98] sm:$0xff] 0.0
          %345 = vst [vmem:[#allocation2 + $0xa0] sm:$0xff] 0.0
          %346 = vst [vmem:[#allocation2 + $0xa8] sm:$0xff] 0.0
          %347 = vst [vmem:[#allocation2 + $0xb0] sm:$0xff] 0.0
          %348 = vst [vmem:[#allocation2 + $0xb8] sm:$0xff] 0.0
          %349 = vst [vmem:[#allocation2 + $0xc0] sm:$0xff] 0.0
          %350 = vst [vmem:[#allocation2 + $0xc8] sm:$0xff] 0.0
          %351 = vst [vmem:[#allocation2 + $0xd0] sm:$0xff] 0.0
          %352 = vst [vmem:[#allocation2 + $0xd8] sm:$0xff] 0.0
          %353 = vst [vmem:[#allocation2 + $0xe0] sm:$0xff] 0.0
          %354 = vst [vmem:[#allocation2 + $0xe8] sm:$0xff] 0.0
          %355 = vst [vmem:[#allocation2 + $0xf0] sm:$0xff] 0.0
          %356 = vst [vmem:[#allocation2 + $0xf8] sm:$0xff] 0.0
          %357 = vst [vmem:[#allocation2 + $0x100] sm:$0xff] 0.0
          %358 = vst [vmem:[#allocation2 + $0x108] sm:$0xff] 0.0
          %359 = vst [vmem:[#allocation2 + $0x110] sm:$0xff] 0.0
          %360 = vst [vmem:[#allocation2 + $0x118] sm:$0xff] 0.0
          %361 = vst [vmem:[#allocation2 + $0x120] sm:$0xff] 0.0
          %362 = vst [vmem:[#allocation2 + $0x128] sm:$0xff] 0.0
          %363 = vst [vmem:[#allocation2 + $0x130] sm:$0xff] 0.0
          %364 = vst [vmem:[#allocation2 + $0x138] sm:$0xff] 0.0
          %365 = vst [vmem:[#allocation2 + $0x140] sm:$0xff] 0.0
          %366 = vst [vmem:[#allocation2 + $0x148] sm:$0xff] 0.0
          %367 = vst [vmem:[#allocation2 + $0x150] sm:$0xff] 0.0
          %368 = vst [vmem:[#allocation2 + $0x158] sm:$0xff] 0.0
          %369 = vst [vmem:[#allocation2 + $0x160] sm:$0xff] 0.0
          %370 = vst [vmem:[#allocation2 + $0x168] sm:$0xff] 0.0
          %371 = vst [vmem:[#allocation2 + $0x170] sm:$0xff] 0.0
          %372 = vst [vmem:[#allocation2 + $0x178] sm:$0xff] 0.0
          %373 = vst [vmem:[#allocation2 + $0x180] sm:$0xff] 0.0
          %374 = vst [vmem:[#allocation2 + $0x188] sm:$0xff] 0.0
          %375 = vst [vmem:[#allocation2 + $0x190] sm:$0xff] 0.0
          %376 = vst [vmem:[#allocation2 + $0x198] sm:$0xff] 0.0
          %377 = vst [vmem:[#allocation2 + $0x1a0] sm:$0xff] 0.0
          %378 = vst [vmem:[#allocation2 + $0x1a8] sm:$0xff] 0.0
          %379 = vst [vmem:[#allocation2 + $0x1b0] sm:$0xff] 0.0
          %380 = vst [vmem:[#allocation2 + $0x1b8] sm:$0xff] 0.0
          %381 = vst [vmem:[#allocation2 + $0x1c0] sm:$0xff] 0.0
          %382 = vst [vmem:[#allocation2 + $0x1c8] sm:$0xff] 0.0
          %383 = vst [vmem:[#allocation2 + $0x1d0] sm:$0xff] 0.0
          %384 = vst [vmem:[#allocation2 + $0x1d8] sm:$0xff] 0.0
          %385 = vst [vmem:[#allocation2 + $0x1e0] sm:$0xff] 0.0
          %386 = vst [vmem:[#allocation2 + $0x1e8] sm:$0xff] 0.0
          %387 = vst [vmem:[#allocation2 + $0x1f0] sm:$0xff] 0.0
          %388 = vst [vmem:[#allocation2 + $0x1f8] sm:$0xff] 0.0
        $region52: #{tpu_custom_call.1} parent=35 // pred_fallthru
          _
        %v389 = vld [vmem:[%s269] sm:$0xff]
        %v390 = vld [vmem:[%s269 + $0x8] sm:$0xff]
        %v391 = vld [vmem:[%s269 + $0x10] sm:$0xff]
        %v392 = vld [vmem:[%s269 + $0x18] sm:$0xff]
        %v393 = vld [vmem:[%s269 + $0x20] sm:$0xff]
        %v394 = vld [vmem:[%s269 + $0x28] sm:$0xff]
        %v395 = vld [vmem:[%s269 + $0x30] sm:$0xff]
        %v396 = vld [vmem:[%s269 + $0x38] sm:$0xff]
        %v397 = vld [vmem:[%s269 + $0x40] sm:$0xff]
        %v398 = vld [vmem:[%s269 + $0x48] sm:$0xff]
        %v399 = vld [vmem:[%s269 + $0x50] sm:$0xff]
        %v400 = vld [vmem:[%s269 + $0x58] sm:$0xff]
        %v401 = vld [vmem:[%s269 + $0x60] sm:$0xff]
        %v402 = vld [vmem:[%s269 + $0x68] sm:$0xff]
        %v403 = vld [vmem:[%s269 + $0x70] sm:$0xff]
        %v404 = vld [vmem:[%s269 + $0x78] sm:$0xff]
        %v405 = vld [vmem:[%s269 + $0x80] sm:$0xff]
        %v406 = vld [vmem:[%s269 + $0x88] sm:$0xff]
        %v407 = vld [vmem:[%s269 + $0x90] sm:$0xff]
        %v408 = vld [vmem:[%s269 + $0x98] sm:$0xff]
        %v409 = vld [vmem:[%s269 + $0xa0] sm:$0xff]
        %v410 = vld [vmem:[%s269 + $0xa8] sm:$0xff]
        %v411 = vld [vmem:[%s269 + $0xb0] sm:$0xff]
        %v412 = vld [vmem:[%s269 + $0xb8] sm:$0xff]
        %v413 = vld [vmem:[%s269 + $0xc0] sm:$0xff]
        %v414 = vld [vmem:[%s269 + $0xc8] sm:$0xff]
        %v415 = vld [vmem:[%s269 + $0xd0] sm:$0xff]
        %v416 = vld [vmem:[%s269 + $0xd8] sm:$0xff]
        %v417 = vld [vmem:[%s269 + $0xe0] sm:$0xff]
        %v418 = vld [vmem:[%s269 + $0xe8] sm:$0xff]
        %v419 = vld [vmem:[%s269 + $0xf0] sm:$0xff]
        %v420 = vld [vmem:[%s269 + $0xf8] sm:$0xff]
        %v421 = vld [vmem:[#allocation2] sm:$0xff]
        %v422 = vld [vmem:[#allocation2 + $0x8] sm:$0xff]
        %v423 = vld [vmem:[#allocation2 + $0x10] sm:$0xff]
        %v424 = vld [vmem:[#allocation2 + $0x18] sm:$0xff]
        %v425 = vld [vmem:[#allocation2 + $0x20] sm:$0xff]
        %v426 = vld [vmem:[#allocation2 + $0x28] sm:$0xff]
        %v427 = vld [vmem:[#allocation2 + $0x30] sm:$0xff]
        %v428 = vld [vmem:[#allocation2 + $0x38] sm:$0xff]
        %v429 = vld [vmem:[#allocation2 + $0x40] sm:$0xff]
        %v430 = vld [vmem:[#allocation2 + $0x48] sm:$0xff]
        %v431 = vld [vmem:[#allocation2 + $0x50] sm:$0xff]
        %v432 = vld [vmem:[#allocation2 + $0x58] sm:$0xff]
        %v433 = vld [vmem:[#allocation2 + $0x60] sm:$0xff]
        %v434 = vld [vmem:[#allocation2 + $0x68] sm:$0xff]
        %v435 = vld [vmem:[#allocation2 + $0x70] sm:$0xff]
        %v436 = vld [vmem:[#allocation2 + $0x78] sm:$0xff]
        %v437 = vld [vmem:[#allocation2 + $0x80] sm:$0xff]
        %v438 = vld [vmem:[#allocation2 + $0x88] sm:$0xff]
        %v439 = vld [vmem:[#allocation2 + $0x90] sm:$0xff]
        %v440 = vld [vmem:[#allocation2 + $0x98] sm:$0xff]
        %v441 = vld [vmem:[#allocation2 + $0xa0] sm:$0xff]
        %v442 = vld [vmem:[#allocation2 + $0xa8] sm:$0xff]
        %v443 = vld [vmem:[#allocation2 + $0xb0] sm:$0xff]
        %v444 = vld [vmem:[#allocation2 + $0xb8] sm:$0xff]
        %v445 = vld [vmem:[#allocation2 + $0xc0] sm:$0xff]
        %v446 = vld [vmem:[#allocation2 + $0xc8] sm:$0xff]
        %v447 = vld [vmem:[#allocation2 + $0xd0] sm:$0xff]
        %v448 = vld [vmem:[#allocation2 + $0xd8] sm:$0xff]
        %v449 = vld [vmem:[#allocation2 + $0xe0] sm:$0xff]
        %v450 = vld [vmem:[#allocation2 + $0xe8] sm:$0xff]
        %v451 = vld [vmem:[#allocation2 + $0xf0] sm:$0xff]
        %v452 = vld [vmem:[#allocation2 + $0xf8] sm:$0xff]
        %v453 = vld [vmem:[#allocation2 + $0x100] sm:$0xff]
        %v454 = vld [vmem:[#allocation2 + $0x108] sm:$0xff]
        %v455 = vld [vmem:[#allocation2 + $0x110] sm:$0xff]
        %v456 = vld [vmem:[#allocation2 + $0x118] sm:$0xff]
        %v457 = vld [vmem:[#allocation2 + $0x120] sm:$0xff]
        %v458 = vld [vmem:[#allocation2 + $0x128] sm:$0xff]
        %v459 = vld [vmem:[#allocation2 + $0x130] sm:$0xff]
        %v460 = vld [vmem:[#allocation2 + $0x138] sm:$0xff]
        %v461 = vld [vmem:[#allocation2 + $0x140] sm:$0xff]
        %v462 = vld [vmem:[#allocation2 + $0x148] sm:$0xff]
        %v463 = vld [vmem:[#allocation2 + $0x150] sm:$0xff]
        %v464 = vld [vmem:[#allocation2 + $0x158] sm:$0xff]
        %v465 = vld [vmem:[#allocation2 + $0x160] sm:$0xff]
        %v466 = vld [vmem:[#allocation2 + $0x168] sm:$0xff]
        %v467 = vld [vmem:[#allocation2 + $0x170] sm:$0xff]
        %v468 = vld [vmem:[#allocation2 + $0x178] sm:$0xff]
        %v469 = vld [vmem:[#allocation2 + $0x180] sm:$0xff]
        %v470 = vld [vmem:[#allocation2 + $0x188] sm:$0xff]
        %v471 = vld [vmem:[#allocation2 + $0x190] sm:$0xff]
        %v472 = vld [vmem:[#allocation2 + $0x198] sm:$0xff]
        %v473 = vld [vmem:[#allocation2 + $0x1a0] sm:$0xff]
        %v474 = vld [vmem:[#allocation2 + $0x1a8] sm:$0xff]
        %v475 = vld [vmem:[#allocation2 + $0x1b0] sm:$0xff]
        %v476 = vld [vmem:[#allocation2 + $0x1b8] sm:$0xff]
        %v477 = vld [vmem:[#allocation2 + $0x1c0] sm:$0xff]
        %v478 = vld [vmem:[#allocation2 + $0x1c8] sm:$0xff]
        %v479 = vld [vmem:[#allocation2 + $0x1d0] sm:$0xff]
        %v480 = vld [vmem:[#allocation2 + $0x1d8] sm:$0xff]
        %v481 = vld [vmem:[#allocation2 + $0x1e0] sm:$0xff]
        %v482 = vld [vmem:[#allocation2 + $0x1e8] sm:$0xff]
        %v483 = vld [vmem:[#allocation2 + $0x1f0] sm:$0xff]
        %v484 = vld [vmem:[#allocation2 + $0x1f8] sm:$0xff]
        %v485 = vld [vmem:[#allocation6] sm:$0xff]
        %v486 = vld [vmem:[#allocation6 + $0x8] sm:$0xff]
        %v487 = vld [vmem:[#allocation6 + $0x10] sm:$0xff]
        %v488 = vld [vmem:[#allocation6 + $0x18] sm:$0xff]
        %v489 = vld [vmem:[#allocation6 + $0x20] sm:$0xff]
        %v490 = vld [vmem:[#allocation6 + $0x28] sm:$0xff]
        %v491 = vld [vmem:[#allocation6 + $0x30] sm:$0xff]
        %v492 = vld [vmem:[#allocation6 + $0x38] sm:$0xff]
        %v493 = vld [vmem:[#allocation6 + $0x40] sm:$0xff]
        %v494 = vld [vmem:[#allocation6 + $0x48] sm:$0xff]
        %v495 = vld [vmem:[#allocation6 + $0x50] sm:$0xff]
        %v496 = vld [vmem:[#allocation6 + $0x58] sm:$0xff]
        %v497 = vld [vmem:[#allocation6 + $0x60] sm:$0xff]
        %v498 = vld [vmem:[#allocation6 + $0x68] sm:$0xff]
        %v499 = vld [vmem:[#allocation6 + $0x70] sm:$0xff]
        %v500 = vld [vmem:[#allocation6 + $0x78] sm:$0xff]
        %v501 = vld [vmem:[#allocation6 + $0x80] sm:$0xff]
        %v502 = vld [vmem:[#allocation6 + $0x88] sm:$0xff]
        %v503 = vld [vmem:[#allocation6 + $0x90] sm:$0xff]
        %v504 = vld [vmem:[#allocation6 + $0x98] sm:$0xff]
        %v505 = vld [vmem:[#allocation6 + $0xa0] sm:$0xff]
        %v506 = vld [vmem:[#allocation6 + $0xa8] sm:$0xff]
        %v507 = vld [vmem:[#allocation6 + $0xb0] sm:$0xff]
        %v508 = vld [vmem:[#allocation6 + $0xb8] sm:$0xff]
        %v509 = vld [vmem:[#allocation6 + $0xc0] sm:$0xff]
        %v510 = vld [vmem:[#allocation6 + $0xc8] sm:$0xff]
        %v511 = vld [vmem:[#allocation6 + $0xd0] sm:$0xff]
        %v512 = vld [vmem:[#allocation6 + $0xd8] sm:$0xff]
        %v513 = vld [vmem:[#allocation6 + $0xe0] sm:$0xff]
        %v514 = vld [vmem:[#allocation6 + $0xe8] sm:$0xff]
        %v515 = vld [vmem:[#allocation6 + $0xf0] sm:$0xff]
        %v516 = vld [vmem:[#allocation6 + $0xf8] sm:$0xff]
        %v549 = vunpack.c.l.b16 %v389
        %v550 = vunpack.c.h.b16 %v389
        %v551 = vunpack.c.l.b16 %v390
        %v552 = vunpack.c.h.b16 %v390
        %v553 = vunpack.c.l.b16 %v391
        %v554 = vunpack.c.h.b16 %v391
        %v555 = vunpack.c.l.b16 %v392
        %v556 = vunpack.c.h.b16 %v392
        %v557 = vunpack.c.l.b16 %v393
        %v558 = vunpack.c.h.b16 %v393
        %v559 = vunpack.c.l.b16 %v394
        %v560 = vunpack.c.h.b16 %v394
        %v561 = vunpack.c.l.b16 %v395
        %v562 = vunpack.c.h.b16 %v395
        %v563 = vunpack.c.l.b16 %v396
        %v564 = vunpack.c.h.b16 %v396
        %v565 = vunpack.c.l.b16 %v397
        %v566 = vunpack.c.h.b16 %v397
        %v567 = vunpack.c.l.b16 %v398
        %v568 = vunpack.c.h.b16 %v398
        %v569 = vunpack.c.l.b16 %v399
        %v570 = vunpack.c.h.b16 %v399
        %v571 = vunpack.c.l.b16 %v400
        %v572 = vunpack.c.h.b16 %v400
        %v573 = vunpack.c.l.b16 %v401
        %v574 = vunpack.c.h.b16 %v401
        %v575 = vunpack.c.l.b16 %v402
        %v576 = vunpack.c.h.b16 %v402
        %v577 = vunpack.c.l.b16 %v403
        %v578 = vunpack.c.h.b16 %v403
        %v579 = vunpack.c.l.b16 %v404
        %v580 = vunpack.c.h.b16 %v404
        %v581 = vunpack.c.l.b16 %v405
        %v582 = vunpack.c.h.b16 %v405
        %v583 = vunpack.c.l.b16 %v406
        %v584 = vunpack.c.h.b16 %v406
        %v585 = vunpack.c.l.b16 %v407
        %v586 = vunpack.c.h.b16 %v407
        %v587 = vunpack.c.l.b16 %v408
        %v588 = vunpack.c.h.b16 %v408
        %v589 = vunpack.c.l.b16 %v409
        %v590 = vunpack.c.h.b16 %v409
        %v591 = vunpack.c.l.b16 %v410
        %v592 = vunpack.c.h.b16 %v410
        %v593 = vunpack.c.l.b16 %v411
        %v594 = vunpack.c.h.b16 %v411
        %v595 = vunpack.c.l.b16 %v412
        %v596 = vunpack.c.h.b16 %v412
        %v597 = vunpack.c.l.b16 %v413
        %v598 = vunpack.c.h.b16 %v413
        %v599 = vunpack.c.l.b16 %v414
        %v600 = vunpack.c.h.b16 %v414
        %v601 = vunpack.c.l.b16 %v415
        %v602 = vunpack.c.h.b16 %v415
        %v603 = vunpack.c.l.b16 %v416
        %v604 = vunpack.c.h.b16 %v416
        %v605 = vunpack.c.l.b16 %v417
        %v606 = vunpack.c.h.b16 %v417
        %v607 = vunpack.c.l.b16 %v418
        %v608 = vunpack.c.h.b16 %v418
        %v609 = vunpack.c.l.b16 %v419
        %v610 = vunpack.c.h.b16 %v419
        %v611 = vunpack.c.l.b16 %v420
        %v612 = vunpack.c.h.b16 %v420
        %v613 = vpack.c.b16 %v551, %v549
        %v614 = vpack.c.b16 %v552, %v550
        %v615 = vpack.c.b16 %v555, %v553
        %v616 = vpack.c.b16 %v556, %v554
        %v617 = vpack.c.b16 %v559, %v557
        %v618 = vpack.c.b16 %v560, %v558
        %v619 = vpack.c.b16 %v563, %v561
        %v620 = vpack.c.b16 %v564, %v562
        %v621 = vpack.c.b16 %v567, %v565
        %v622 = vpack.c.b16 %v568, %v566
        %v623 = vpack.c.b16 %v571, %v569
        %v624 = vpack.c.b16 %v572, %v570
        %v625 = vpack.c.b16 %v575, %v573
        %v626 = vpack.c.b16 %v576, %v574
        %v627 = vpack.c.b16 %v579, %v577
        %v628 = vpack.c.b16 %v580, %v578
        %v629 = vpack.c.b16 %v583, %v581
        %v630 = vpack.c.b16 %v584, %v582
        %v631 = vpack.c.b16 %v587, %v585
        %v632 = vpack.c.b16 %v588, %v586
        %v633 = vpack.c.b16 %v591, %v589
        %v634 = vpack.c.b16 %v592, %v590
        %v635 = vpack.c.b16 %v595, %v593
        %v636 = vpack.c.b16 %v596, %v594
        %v637 = vpack.c.b16 %v599, %v597
        %v638 = vpack.c.b16 %v600, %v598
        %v639 = vpack.c.b16 %v603, %v601
        %v640 = vpack.c.b16 %v604, %v602
        %v641 = vpack.c.b16 %v607, %v605
        %v642 = vpack.c.b16 %v608, %v606
        %v643 = vpack.c.b16 %v611, %v609
        %v644 = vpack.c.b16 %v612, %v610
        %v709 = vunpack.c.l.b16 %v485
        %v710 = vunpack.c.h.b16 %v485
        %v711 = vunpack.c.l.b16 %v486
        %v712 = vunpack.c.h.b16 %v486
        %v713 = vunpack.c.l.b16 %v487
        %v714 = vunpack.c.h.b16 %v487
        %v715 = vunpack.c.l.b16 %v488
        %v716 = vunpack.c.h.b16 %v488
        %v717 = vunpack.c.l.b16 %v489
        %v718 = vunpack.c.h.b16 %v489
        %v719 = vunpack.c.l.b16 %v490
        %v720 = vunpack.c.h.b16 %v490
        %v721 = vunpack.c.l.b16 %v491
        %v722 = vunpack.c.h.b16 %v491
        %v723 = vunpack.c.l.b16 %v492
        %v724 = vunpack.c.h.b16 %v492
        %v725 = vunpack.c.l.b16 %v493
        %v726 = vunpack.c.h.b16 %v493
        %v727 = vunpack.c.l.b16 %v494
        %v728 = vunpack.c.h.b16 %v494
        %v729 = vunpack.c.l.b16 %v495
        %v730 = vunpack.c.h.b16 %v495
        %v731 = vunpack.c.l.b16 %v496
        %v732 = vunpack.c.h.b16 %v496
        %v733 = vunpack.c.l.b16 %v497
        %v734 = vunpack.c.h.b16 %v497
        %v735 = vunpack.c.l.b16 %v498
        %v736 = vunpack.c.h.b16 %v498
        %v737 = vunpack.c.l.b16 %v499
        %v738 = vunpack.c.h.b16 %v499
        %v739 = vunpack.c.l.b16 %v500
        %v740 = vunpack.c.h.b16 %v500
        %v741 = vunpack.c.l.b16 %v501
        %v742 = vunpack.c.h.b16 %v501
        %v743 = vunpack.c.l.b16 %v502
        %v744 = vunpack.c.h.b16 %v502
        %v745 = vunpack.c.l.b16 %v503
        %v746 = vunpack.c.h.b16 %v503
        %v747 = vunpack.c.l.b16 %v504
        %v748 = vunpack.c.h.b16 %v504
        %v749 = vunpack.c.l.b16 %v505
        %v750 = vunpack.c.h.b16 %v505
        %v751 = vunpack.c.l.b16 %v506
        %v752 = vunpack.c.h.b16 %v506
        %v753 = vunpack.c.l.b16 %v507
        %v754 = vunpack.c.h.b16 %v507
        %v755 = vunpack.c.l.b16 %v508
        %v756 = vunpack.c.h.b16 %v508
        %v757 = vunpack.c.l.b16 %v509
        %v758 = vunpack.c.h.b16 %v509
        %v759 = vunpack.c.l.b16 %v510
        %v760 = vunpack.c.h.b16 %v510
        %v761 = vunpack.c.l.b16 %v511
        %v762 = vunpack.c.h.b16 %v511
        %v763 = vunpack.c.l.b16 %v512
        %v764 = vunpack.c.h.b16 %v512
        %v765 = vunpack.c.l.b16 %v513
        %v766 = vunpack.c.h.b16 %v513
        %v767 = vunpack.c.l.b16 %v514
        %v768 = vunpack.c.h.b16 %v514
        %v769 = vunpack.c.l.b16 %v515
        %v770 = vunpack.c.h.b16 %v515
        %v771 = vunpack.c.l.b16 %v516
        %v772 = vunpack.c.h.b16 %v516
        %v773 = vpack.c.b16 %v711, %v709
        %v774 = vpack.c.b16 %v712, %v710
        %v775 = vpack.c.b16 %v715, %v713
        %v776 = vpack.c.b16 %v716, %v714
        %v777 = vpack.c.b16 %v719, %v717
        %v778 = vpack.c.b16 %v720, %v718
        %v779 = vpack.c.b16 %v723, %v721
        %v780 = vpack.c.b16 %v724, %v722
        %v781 = vpack.c.b16 %v727, %v725
        %v782 = vpack.c.b16 %v728, %v726
        %v783 = vpack.c.b16 %v731, %v729
        %v784 = vpack.c.b16 %v732, %v730
        %v785 = vpack.c.b16 %v735, %v733
        %v786 = vpack.c.b16 %v736, %v734
        %v787 = vpack.c.b16 %v739, %v737
        %v788 = vpack.c.b16 %v740, %v738
        %v789 = vpack.c.b16 %v743, %v741
        %v790 = vpack.c.b16 %v744, %v742
        %v791 = vpack.c.b16 %v747, %v745
        %v792 = vpack.c.b16 %v748, %v746
        %v793 = vpack.c.b16 %v751, %v749
        %v794 = vpack.c.b16 %v752, %v750
        %v795 = vpack.c.b16 %v755, %v753
        %v796 = vpack.c.b16 %v756, %v754
        %v797 = vpack.c.b16 %v759, %v757
        %v798 = vpack.c.b16 %v760, %v758
        %v799 = vpack.c.b16 %v763, %v761
        %v800 = vpack.c.b16 %v764, %v762
        %v801 = vpack.c.b16 %v767, %v765
        %v802 = vpack.c.b16 %v768, %v766
        %v803 = vpack.c.b16 %v771, %v769
        %v804 = vpack.c.b16 %v772, %v770
        %837 = vmatpush.bf16.msra.mxu0 %v787
        %838 = vmatpush.bf16.msra.mxu0 %v785
        %839 = vmatpush.bf16.msra.mxu0 %v783
        %840 = vmatpush.bf16.msra.mxu0 %v781
        %841 = vmatpush.bf16.msra.mxu0 %v779
        %842 = vmatpush.bf16.msra.mxu0 %v777
        %843 = vmatpush.bf16.msra.mxu0 %v775
        %844 = vmatpush.bf16.msra.mxu0 %v773
        %845 = vmatmul.bf16.gmra.mxu0 %v613
        %v846 = vpop.f32.mrf.mxu0
        %v847 = vadd.f32 0.0, %v846
        %v848 = vpop.f32.mrf.mxu0
        %v849 = vadd.f32 0.0, %v848
        %850 = vmatmul.bf16.gmra.mxu0 %v615
        %v851 = vpop.f32.mrf.mxu0
        %v852 = vadd.f32 0.0, %v851
        %v853 = vpop.f32.mrf.mxu0
        %v854 = vadd.f32 0.0, %v853
        %855 = vmatmul.bf16.gmra.mxu0 %v617
        %v856 = vpop.f32.mrf.mxu0
        %v857 = vadd.f32 0.0, %v856
        %v858 = vpop.f32.mrf.mxu0
        %v859 = vadd.f32 0.0, %v858
        %860 = vmatmul.bf16.gmra.mxu0 %v619
        %v861 = vpop.f32.mrf.mxu0
        %v862 = vadd.f32 0.0, %v861
        %v863 = vpop.f32.mrf.mxu0
        %v864 = vadd.f32 0.0, %v863
        %865 = vmatmul.bf16.gmra.mxu0 %v621
        %v866 = vpop.f32.mrf.mxu0
        %v867 = vadd.f32 0.0, %v866
        %v868 = vpop.f32.mrf.mxu0
        %v869 = vadd.f32 0.0, %v868
        %870 = vmatmul.bf16.gmra.mxu0 %v623
        %v871 = vpop.f32.mrf.mxu0
        %v872 = vadd.f32 0.0, %v871
        %v873 = vpop.f32.mrf.mxu0
        %v874 = vadd.f32 0.0, %v873
        %875 = vmatmul.bf16.gmra.mxu0 %v625
        %v876 = vpop.f32.mrf.mxu0
        %v877 = vadd.f32 0.0, %v876
        %v878 = vpop.f32.mrf.mxu0
        %v879 = vadd.f32 0.0, %v878
        %880 = vmatmul.bf16.gmra.mxu0 %v627
        %v881 = vpop.f32.mrf.mxu0
        %v882 = vadd.f32 0.0, %v881
        %v883 = vpop.f32.mrf.mxu0
        %v884 = vadd.f32 0.0, %v883
        %885 = vmatmul.bf16.gmra.mxu0 %v629
        %v886 = vpop.f32.mrf.mxu0
        %v887 = vadd.f32 0.0, %v886
        %v888 = vpop.f32.mrf.mxu0
        %v889 = vadd.f32 0.0, %v888
        %890 = vmatmul.bf16.gmra.mxu0 %v631
        %v891 = vpop.f32.mrf.mxu0
        %v892 = vadd.f32 0.0, %v891
        %v893 = vpop.f32.mrf.mxu0
        %v894 = vadd.f32 0.0, %v893
        %895 = vmatmul.bf16.gmra.mxu0 %v633
        %v896 = vpop.f32.mrf.mxu0
        %v897 = vadd.f32 0.0, %v896
        %v898 = vpop.f32.mrf.mxu0
        %v899 = vadd.f32 0.0, %v898
        %900 = vmatmul.bf16.gmra.mxu0 %v635
        %v901 = vpop.f32.mrf.mxu0
        %v902 = vadd.f32 0.0, %v901
        %v903 = vpop.f32.mrf.mxu0
        %v904 = vadd.f32 0.0, %v903
        %905 = vmatmul.bf16.gmra.mxu0 %v637
        %v906 = vpop.f32.mrf.mxu0
        %v907 = vadd.f32 0.0, %v906
        %v908 = vpop.f32.mrf.mxu0
        %v909 = vadd.f32 0.0, %v908
        %910 = vmatmul.bf16.gmra.mxu0 %v639
        %v911 = vpop.f32.mrf.mxu0
        %v912 = vadd.f32 0.0, %v911
        %v913 = vpop.f32.mrf.mxu0
        %v914 = vadd.f32 0.0, %v913
        %915 = vmatmul.bf16.gmra.mxu0 %v641
        %v916 = vpop.f32.mrf.mxu0
        %v917 = vadd.f32 0.0, %v916
        %v918 = vpop.f32.mrf.mxu0
        %v919 = vadd.f32 0.0, %v918
        %920 = vmatmul.bf16.gmra.mxu0 %v643
        %v921 = vpop.f32.mrf.mxu0
        %v922 = vadd.f32 0.0, %v921
        %v923 = vpop.f32.mrf.mxu0
        %v924 = vadd.f32 0.0, %v923
        %925 = vdwg.mxu0
        %926 = vmatpush.bf16.msra.mxu0 %v803
        %927 = vmatpush.bf16.msra.mxu0 %v801
        %928 = vmatpush.bf16.msra.mxu0 %v799
        %929 = vmatpush.bf16.msra.mxu0 %v797
        %930 = vmatpush.bf16.msra.mxu0 %v795
        %931 = vmatpush.bf16.msra.mxu0 %v793
        %932 = vmatpush.bf16.msra.mxu0 %v791
        %933 = vmatpush.bf16.msra.mxu0 %v789
        %934 = vmatmul.bf16.gmra.mxu0 %v614
        %v935 = vpop.f32.mrf.mxu0
        %v936 = vadd.f32 %v847, %v935
        %v937 = vpop.f32.mrf.mxu0
        %v938 = vadd.f32 %v849, %v937
        %939 = vmatmul.bf16.gmra.mxu0 %v616
        %v940 = vpop.f32.mrf.mxu0
        %v941 = vadd.f32 %v852, %v940
        %v942 = vpop.f32.mrf.mxu0
        %v943 = vadd.f32 %v854, %v942
        %944 = vmatmul.bf16.gmra.mxu0 %v618
        %v945 = vpop.f32.mrf.mxu0
        %v946 = vadd.f32 %v857, %v945
        %v947 = vpop.f32.mrf.mxu0
        %v948 = vadd.f32 %v859, %v947
        %949 = vmatmul.bf16.gmra.mxu0 %v620
        %v950 = vpop.f32.mrf.mxu0
        %v951 = vadd.f32 %v862, %v950
        %v952 = vpop.f32.mrf.mxu0
        %v953 = vadd.f32 %v864, %v952
        %954 = vmatmul.bf16.gmra.mxu0 %v622
        %v955 = vpop.f32.mrf.mxu0
        %v956 = vadd.f32 %v867, %v955
        %v957 = vpop.f32.mrf.mxu0
        %v958 = vadd.f32 %v869, %v957
        %959 = vmatmul.bf16.gmra.mxu0 %v624
        %v960 = vpop.f32.mrf.mxu0
        %v961 = vadd.f32 %v872, %v960
        %v962 = vpop.f32.mrf.mxu0
        %v963 = vadd.f32 %v874, %v962
        %964 = vmatmul.bf16.gmra.mxu0 %v626
        %v965 = vpop.f32.mrf.mxu0
        %v966 = vadd.f32 %v877, %v965
        %v967 = vpop.f32.mrf.mxu0
        %v968 = vadd.f32 %v879, %v967
        %969 = vmatmul.bf16.gmra.mxu0 %v628
        %v970 = vpop.f32.mrf.mxu0
        %v971 = vadd.f32 %v882, %v970
        %v972 = vpop.f32.mrf.mxu0
        %v973 = vadd.f32 %v884, %v972
        %974 = vmatmul.bf16.gmra.mxu0 %v630
        %v975 = vpop.f32.mrf.mxu0
        %v976 = vadd.f32 %v887, %v975
        %v977 = vpop.f32.mrf.mxu0
        %v978 = vadd.f32 %v889, %v977
        %979 = vmatmul.bf16.gmra.mxu0 %v632
        %v980 = vpop.f32.mrf.mxu0
        %v981 = vadd.f32 %v892, %v980
        %v982 = vpop.f32.mrf.mxu0
        %v983 = vadd.f32 %v894, %v982
        %984 = vmatmul.bf16.gmra.mxu0 %v634
        %v985 = vpop.f32.mrf.mxu0
        %v986 = vadd.f32 %v897, %v985
        %v987 = vpop.f32.mrf.mxu0
        %v988 = vadd.f32 %v899, %v987
        %989 = vmatmul.bf16.gmra.mxu0 %v636
        %v990 = vpop.f32.mrf.mxu0
        %v991 = vadd.f32 %v902, %v990
        %v992 = vpop.f32.mrf.mxu0
        %v993 = vadd.f32 %v904, %v992
        %994 = vmatmul.bf16.gmra.mxu0 %v638
        %v995 = vpop.f32.mrf.mxu0
        %v996 = vadd.f32 %v907, %v995
        %v997 = vpop.f32.mrf.mxu0
        %v998 = vadd.f32 %v909, %v997
        %999 = vmatmul.bf16.gmra.mxu0 %v640
        %v1000 = vpop.f32.mrf.mxu0
        %v1001 = vadd.f32 %v912, %v1000
        %v1002 = vpop.f32.mrf.mxu0
        %v1003 = vadd.f32 %v914, %v1002
        %1004 = vmatmul.bf16.gmra.mxu0 %v642
        %v1005 = vpop.f32.mrf.mxu0
        %v1006 = vadd.f32 %v917, %v1005
        %v1007 = vpop.f32.mrf.mxu0
        %v1008 = vadd.f32 %v919, %v1007
        %1009 = vmatmul.bf16.gmra.mxu0 %v644
        %v1010 = vpop.f32.mrf.mxu0
        %v1011 = vadd.f32 %v922, %v1010
        %v1012 = vpop.f32.mrf.mxu0
        %v1013 = vadd.f32 %v924, %v1012
        %1014 = vdwg.mxu0
        %1015 = vmatpush.bf16.msra.mxu0 %v788
        %1016 = vmatpush.bf16.msra.mxu0 %v786
        %1017 = vmatpush.bf16.msra.mxu0 %v784
        %1018 = vmatpush.bf16.msra.mxu0 %v782
        %1019 = vmatpush.bf16.msra.mxu0 %v780
        %1020 = vmatpush.bf16.msra.mxu0 %v778
        %1021 = vmatpush.bf16.msra.mxu0 %v776
        %1022 = vmatpush.bf16.msra.mxu0 %v774
        %1023 = vmatmul.bf16.gmra.mxu0 %v613
        %v1024 = vpop.f32.mrf.mxu0
        %v1025 = vadd.f32 0.0, %v1024
        %v1026 = vpop.f32.mrf.mxu0
        %v1027 = vadd.f32 0.0, %v1026
        %1028 = vmatmul.bf16.gmra.mxu0 %v615
        %v1029 = vpop.f32.mrf.mxu0
        %v1030 = vadd.f32 0.0, %v1029
        %v1031 = vpop.f32.mrf.mxu0
        %v1032 = vadd.f32 0.0, %v1031
        %1033 = vmatmul.bf16.gmra.mxu0 %v617
        %v1034 = vpop.f32.mrf.mxu0
        %v1035 = vadd.f32 0.0, %v1034
        %v1036 = vpop.f32.mrf.mxu0
        %v1037 = vadd.f32 0.0, %v1036
        %1038 = vmatmul.bf16.gmra.mxu0 %v619
        %v1039 = vpop.f32.mrf.mxu0
        %v1040 = vadd.f32 0.0, %v1039
        %v1041 = vpop.f32.mrf.mxu0
        %v1042 = vadd.f32 0.0, %v1041
        %1043 = vmatmul.bf16.gmra.mxu0 %v621
        %v1044 = vpop.f32.mrf.mxu0
        %v1045 = vadd.f32 0.0, %v1044
        %v1046 = vpop.f32.mrf.mxu0
        %v1047 = vadd.f32 0.0, %v1046
        %1048 = vmatmul.bf16.gmra.mxu0 %v623
        %v1049 = vpop.f32.mrf.mxu0
        %v1050 = vadd.f32 0.0, %v1049
        %v1051 = vpop.f32.mrf.mxu0
        %v1052 = vadd.f32 0.0, %v1051
        %1053 = vmatmul.bf16.gmra.mxu0 %v625
        %v1054 = vpop.f32.mrf.mxu0
        %v1055 = vadd.f32 0.0, %v1054
        %v1056 = vpop.f32.mrf.mxu0
        %v1057 = vadd.f32 0.0, %v1056
        %1058 = vmatmul.bf16.gmra.mxu0 %v627
        %v1059 = vpop.f32.mrf.mxu0
        %v1060 = vadd.f32 0.0, %v1059
        %v1061 = vpop.f32.mrf.mxu0
        %v1062 = vadd.f32 0.0, %v1061
        %1063 = vmatmul.bf16.gmra.mxu0 %v629
        %v1064 = vpop.f32.mrf.mxu0
        %v1065 = vadd.f32 0.0, %v1064
        %v1066 = vpop.f32.mrf.mxu0
        %v1067 = vadd.f32 0.0, %v1066
        %1068 = vmatmul.bf16.gmra.mxu0 %v631
        %v1069 = vpop.f32.mrf.mxu0
        %v1070 = vadd.f32 0.0, %v1069
        %v1071 = vpop.f32.mrf.mxu0
        %v1072 = vadd.f32 0.0, %v1071
        %1073 = vmatmul.bf16.gmra.mxu0 %v633
        %v1074 = vpop.f32.mrf.mxu0
        %v1075 = vadd.f32 0.0, %v1074
        %v1076 = vpop.f32.mrf.mxu0
        %v1077 = vadd.f32 0.0, %v1076
        %1078 = vmatmul.bf16.gmra.mxu0 %v635
        %v1079 = vpop.f32.mrf.mxu0
        %v1080 = vadd.f32 0.0, %v1079
        %v1081 = vpop.f32.mrf.mxu0
        %v1082 = vadd.f32 0.0, %v1081
        %1083 = vmatmul.bf16.gmra.mxu0 %v637
        %v1084 = vpop.f32.mrf.mxu0
        %v1085 = vadd.f32 0.0, %v1084
        %v1086 = vpop.f32.mrf.mxu0
        %v1087 = vadd.f32 0.0, %v1086
        %1088 = vmatmul.bf16.gmra.mxu0 %v639
        %v1089 = vpop.f32.mrf.mxu0
        %v1090 = vadd.f32 0.0, %v1089
        %v1091 = vpop.f32.mrf.mxu0
        %v1092 = vadd.f32 0.0, %v1091
        %1093 = vmatmul.bf16.gmra.mxu0 %v641
        %v1094 = vpop.f32.mrf.mxu0
        %v1095 = vadd.f32 0.0, %v1094
        %v1096 = vpop.f32.mrf.mxu0
        %v1097 = vadd.f32 0.0, %v1096
        %1098 = vmatmul.bf16.gmra.mxu0 %v643
        %v1099 = vpop.f32.mrf.mxu0
        %v1100 = vadd.f32 0.0, %v1099
        %v1101 = vpop.f32.mrf.mxu0
        %v1102 = vadd.f32 0.0, %v1101
        %1103 = vdwg.mxu0
        %1104 = vmatpush.bf16.msra.mxu0 %v804
        %1105 = vmatpush.bf16.msra.mxu0 %v802
        %1106 = vmatpush.bf16.msra.mxu0 %v800
        %1107 = vmatpush.bf16.msra.mxu0 %v798
        %1108 = vmatpush.bf16.msra.mxu0 %v796
        %1109 = vmatpush.bf16.msra.mxu0 %v794
        %1110 = vmatpush.bf16.msra.mxu0 %v792
        %1111 = vmatpush.bf16.msra.mxu0 %v790
        %1112 = vmatmul.bf16.gmra.mxu0 %v614
        %v1113 = vpop.f32.mrf.mxu0
        %v1114 = vadd.f32 %v1025, %v1113
        %v1115 = vpop.f32.mrf.mxu0
        %v1116 = vadd.f32 %v1027, %v1115
        %1117 = vmatmul.bf16.gmra.mxu0 %v616
        %v1118 = vpop.f32.mrf.mxu0
        %v1119 = vadd.f32 %v1030, %v1118
        %v1120 = vpop.f32.mrf.mxu0
        %v1121 = vadd.f32 %v1032, %v1120
        %1122 = vmatmul.bf16.gmra.mxu0 %v618
        %v1123 = vpop.f32.mrf.mxu0
        %v1124 = vadd.f32 %v1035, %v1123
        %v1125 = vpop.f32.mrf.mxu0
        %v1126 = vadd.f32 %v1037, %v1125
        %1127 = vmatmul.bf16.gmra.mxu0 %v620
        %v1128 = vpop.f32.mrf.mxu0
        %v1129 = vadd.f32 %v1040, %v1128
        %v1130 = vpop.f32.mrf.mxu0
        %v1131 = vadd.f32 %v1042, %v1130
        %1132 = vmatmul.bf16.gmra.mxu0 %v622
        %v1133 = vpop.f32.mrf.mxu0
        %v1134 = vadd.f32 %v1045, %v1133
        %v1135 = vpop.f32.mrf.mxu0
        %v1136 = vadd.f32 %v1047, %v1135
        %1137 = vmatmul.bf16.gmra.mxu0 %v624
        %v1138 = vpop.f32.mrf.mxu0
        %v1139 = vadd.f32 %v1050, %v1138
        %v1140 = vpop.f32.mrf.mxu0
        %v1141 = vadd.f32 %v1052, %v1140
        %1142 = vmatmul.bf16.gmra.mxu0 %v626
        %v1143 = vpop.f32.mrf.mxu0
        %v1144 = vadd.f32 %v1055, %v1143
        %v1145 = vpop.f32.mrf.mxu0
        %v1146 = vadd.f32 %v1057, %v1145
        %1147 = vmatmul.bf16.gmra.mxu0 %v628
        %v1148 = vpop.f32.mrf.mxu0
        %v1149 = vadd.f32 %v1060, %v1148
        %v1150 = vpop.f32.mrf.mxu0
        %v1151 = vadd.f32 %v1062, %v1150
        %1152 = vmatmul.bf16.gmra.mxu0 %v630
        %v1153 = vpop.f32.mrf.mxu0
        %v1154 = vadd.f32 %v1065, %v1153
        %v1155 = vpop.f32.mrf.mxu0
        %v1156 = vadd.f32 %v1067, %v1155
        %1157 = vmatmul.bf16.gmra.mxu0 %v632
        %v1158 = vpop.f32.mrf.mxu0
        %v1159 = vadd.f32 %v1070, %v1158
        %v1160 = vpop.f32.mrf.mxu0
        %v1161 = vadd.f32 %v1072, %v1160
        %1162 = vmatmul.bf16.gmra.mxu0 %v634
        %v1163 = vpop.f32.mrf.mxu0
        %v1164 = vadd.f32 %v1075, %v1163
        %v1165 = vpop.f32.mrf.mxu0
        %v1166 = vadd.f32 %v1077, %v1165
        %1167 = vmatmul.bf16.gmra.mxu0 %v636
        %v1168 = vpop.f32.mrf.mxu0
        %v1169 = vadd.f32 %v1080, %v1168
        %v1170 = vpop.f32.mrf.mxu0
        %v1171 = vadd.f32 %v1082, %v1170
        %1172 = vmatmul.bf16.gmra.mxu0 %v638
        %v1173 = vpop.f32.mrf.mxu0
        %v1174 = vadd.f32 %v1085, %v1173
        %v1175 = vpop.f32.mrf.mxu0
        %v1176 = vadd.f32 %v1087, %v1175
        %1177 = vmatmul.bf16.gmra.mxu0 %v640
        %v1178 = vpop.f32.mrf.mxu0
        %v1179 = vadd.f32 %v1090, %v1178
        %v1180 = vpop.f32.mrf.mxu0
        %v1181 = vadd.f32 %v1092, %v1180
        %1182 = vmatmul.bf16.gmra.mxu0 %v642
        %v1183 = vpop.f32.mrf.mxu0
        %v1184 = vadd.f32 %v1095, %v1183
        %v1185 = vpop.f32.mrf.mxu0
        %v1186 = vadd.f32 %v1097, %v1185
        %1187 = vmatmul.bf16.gmra.mxu0 %v644
        %v1188 = vpop.f32.mrf.mxu0
        %v1189 = vadd.f32 %v1100, %v1188
        %v1190 = vpop.f32.mrf.mxu0
        %v1191 = vadd.f32 %v1102, %v1190
        %1192 = vdwg.mxu0
        %v1193 = vadd.f32 %v421, %v936
        %v1194 = vadd.f32 %v422, %v1114
        %v1195 = vadd.f32 %v423, %v938
        %v1196 = vadd.f32 %v424, %v1116
        %v1197 = vadd.f32 %v425, %v941
        %v1198 = vadd.f32 %v426, %v1119
        %v1199 = vadd.f32 %v427, %v943
        %v1200 = vadd.f32 %v428, %v1121
        %v1201 = vadd.f32 %v429, %v946
        %v1202 = vadd.f32 %v430, %v1124
        %v1203 = vadd.f32 %v431, %v948
        %v1204 = vadd.f32 %v432, %v1126
        %v1205 = vadd.f32 %v433, %v951
        %v1206 = vadd.f32 %v434, %v1129
        %v1207 = vadd.f32 %v435, %v953
        %v1208 = vadd.f32 %v436, %v1131
        %v1209 = vadd.f32 %v437, %v956
        %v1210 = vadd.f32 %v438, %v1134
        %v1211 = vadd.f32 %v439, %v958
        %v1212 = vadd.f32 %v440, %v1136
        %v1213 = vadd.f32 %v441, %v961
        %v1214 = vadd.f32 %v442, %v1139
        %v1215 = vadd.f32 %v443, %v963
        %v1216 = vadd.f32 %v444, %v1141
        %v1217 = vadd.f32 %v445, %v966
        %v1218 = vadd.f32 %v446, %v1144
        %v1219 = vadd.f32 %v447, %v968
        %v1220 = vadd.f32 %v448, %v1146
        %v1221 = vadd.f32 %v449, %v971
        %v1222 = vadd.f32 %v450, %v1149
        %v1223 = vadd.f32 %v451, %v973
        %v1224 = vadd.f32 %v452, %v1151
        %v1225 = vadd.f32 %v453, %v976
        %v1226 = vadd.f32 %v454, %v1154
        %v1227 = vadd.f32 %v455, %v978
        %v1228 = vadd.f32 %v456, %v1156
        %v1229 = vadd.f32 %v457, %v981
        %v1230 = vadd.f32 %v458, %v1159
        %v1231 = vadd.f32 %v459, %v983
        %v1232 = vadd.f32 %v460, %v1161
        %v1233 = vadd.f32 %v461, %v986
        %v1234 = vadd.f32 %v462, %v1164
        %v1235 = vadd.f32 %v463, %v988
        %v1236 = vadd.f32 %v464, %v1166
        %v1237 = vadd.f32 %v465, %v991
        %v1238 = vadd.f32 %v466, %v1169
        %v1239 = vadd.f32 %v467, %v993
        %v1240 = vadd.f32 %v468, %v1171
        %v1241 = vadd.f32 %v469, %v996
        %v1242 = vadd.f32 %v470, %v1174
        %v1243 = vadd.f32 %v471, %v998
        %v1244 = vadd.f32 %v472, %v1176
        %v1245 = vadd.f32 %v473, %v1001
        %v1246 = vadd.f32 %v474, %v1179
        %v1247 = vadd.f32 %v475, %v1003
        %v1248 = vadd.f32 %v476, %v1181
        %v1249 = vadd.f32 %v477, %v1006
        %v1250 = vadd.f32 %v478, %v1184
        %v1251 = vadd.f32 %v479, %v1008
        %v1252 = vadd.f32 %v480, %v1186
        %v1253 = vadd.f32 %v481, %v1011
        %v1254 = vadd.f32 %v482, %v1189
        %v1255 = vadd.f32 %v483, %v1013
        %v1256 = vadd.f32 %v484, %v1191
        %1257 = vst [vmem:[#allocation2] sm:$0xff] %v1193
        %1258 = vst [vmem:[#allocation2 + $0x8] sm:$0xff] %v1194
        %1259 = vst [vmem:[#allocation2 + $0x10] sm:$0xff] %v1195
        %1260 = vst [vmem:[#allocation2 + $0x18] sm:$0xff] %v1196
        %1261 = vst [vmem:[#allocation2 + $0x20] sm:$0xff] %v1197
        %1262 = vst [vmem:[#allocation2 + $0x28] sm:$0xff] %v1198
        %1263 = vst [vmem:[#allocation2 + $0x30] sm:$0xff] %v1199
        %1264 = vst [vmem:[#allocation2 + $0x38] sm:$0xff] %v1200
        %1265 = vst [vmem:[#allocation2 + $0x40] sm:$0xff] %v1201
        %1266 = vst [vmem:[#allocation2 + $0x48] sm:$0xff] %v1202
        %1267 = vst [vmem:[#allocation2 + $0x50] sm:$0xff] %v1203
        %1268 = vst [vmem:[#allocation2 + $0x58] sm:$0xff] %v1204
        %1269 = vst [vmem:[#allocation2 + $0x60] sm:$0xff] %v1205
        %1270 = vst [vmem:[#allocation2 + $0x68] sm:$0xff] %v1206
        %1271 = vst [vmem:[#allocation2 + $0x70] sm:$0xff] %v1207
        %1272 = vst [vmem:[#allocation2 + $0x78] sm:$0xff] %v1208
        %1273 = vst [vmem:[#allocation2 + $0x80] sm:$0xff] %v1209
        %1274 = vst [vmem:[#allocation2 + $0x88] sm:$0xff] %v1210
        %1275 = vst [vmem:[#allocation2 + $0x90] sm:$0xff] %v1211
        %1276 = vst [vmem:[#allocation2 + $0x98] sm:$0xff] %v1212
        %1277 = vst [vmem:[#allocation2 + $0xa0] sm:$0xff] %v1213
        %1278 = vst [vmem:[#allocation2 + $0xa8] sm:$0xff] %v1214
        %1279 = vst [vmem:[#allocation2 + $0xb0] sm:$0xff] %v1215
        %1280 = vst [vmem:[#allocation2 + $0xb8] sm:$0xff] %v1216
        %1281 = vst [vmem:[#allocation2 + $0xc0] sm:$0xff] %v1217
        %1282 = vst [vmem:[#allocation2 + $0xc8] sm:$0xff] %v1218
        %1283 = vst [vmem:[#allocation2 + $0xd0] sm:$0xff] %v1219
        %1284 = vst [vmem:[#allocation2 + $0xd8] sm:$0xff] %v1220
        %1285 = vst [vmem:[#allocation2 + $0xe0] sm:$0xff] %v1221
        %1286 = vst [vmem:[#allocation2 + $0xe8] sm:$0xff] %v1222
        %1287 = vst [vmem:[#allocation2 + $0xf0] sm:$0xff] %v1223
        %1288 = vst [vmem:[#allocation2 + $0xf8] sm:$0xff] %v1224
        %1289 = vst [vmem:[#allocation2 + $0x100] sm:$0xff] %v1225
        %1290 = vst [vmem:[#allocation2 + $0x108] sm:$0xff] %v1226
        %1291 = vst [vmem:[#allocation2 + $0x110] sm:$0xff] %v1227
        %1292 = vst [vmem:[#allocation2 + $0x118] sm:$0xff] %v1228
        %1293 = vst [vmem:[#allocation2 + $0x120] sm:$0xff] %v1229
        %1294 = vst [vmem:[#allocation2 + $0x128] sm:$0xff] %v1230
        %1295 = vst [vmem:[#allocation2 + $0x130] sm:$0xff] %v1231
        %1296 = vst [vmem:[#allocation2 + $0x138] sm:$0xff] %v1232
        %1297 = vst [vmem:[#allocation2 + $0x140] sm:$0xff] %v1233
        %1298 = vst [vmem:[#allocation2 + $0x148] sm:$0xff] %v1234
        %1299 = vst [vmem:[#allocation2 + $0x150] sm:$0xff] %v1235
        %1300 = vst [vmem:[#allocation2 + $0x158] sm:$0xff] %v1236
        %1301 = vst [vmem:[#allocation2 + $0x160] sm:$0xff] %v1237
        %1302 = vst [vmem:[#allocation2 + $0x168] sm:$0xff] %v1238
        %1303 = vst [vmem:[#allocation2 + $0x170] sm:$0xff] %v1239
        %1304 = vst [vmem:[#allocation2 + $0x178] sm:$0xff] %v1240
        %1305 = vst [vmem:[#allocation2 + $0x180] sm:$0xff] %v1241
        %1306 = vst [vmem:[#allocation2 + $0x188] sm:$0xff] %v1242
        %1307 = vst [vmem:[#allocation2 + $0x190] sm:$0xff] %v1243
        %1308 = vst [vmem:[#allocation2 + $0x198] sm:$0xff] %v1244
        %1309 = vst [vmem:[#allocation2 + $0x1a0] sm:$0xff] %v1245
        %1310 = vst [vmem:[#allocation2 + $0x1a8] sm:$0xff] %v1246
        %1311 = vst [vmem:[#allocation2 + $0x1b0] sm:$0xff] %v1247
        %1312 = vst [vmem:[#allocation2 + $0x1b8] sm:$0xff] %v1248
        %1313 = vst [vmem:[#allocation2 + $0x1c0] sm:$0xff] %v1249
        %1314 = vst [vmem:[#allocation2 + $0x1c8] sm:$0xff] %v1250
        %1315 = vst [vmem:[#allocation2 + $0x1d0] sm:$0xff] %v1251
        %1316 = vst [vmem:[#allocation2 + $0x1d8] sm:$0xff] %v1252
        %1317 = vst [vmem:[#allocation2 + $0x1e0] sm:$0xff] %v1253
        %1318 = vst [vmem:[#allocation2 + $0x1e8] sm:$0xff] %v1254
        %1319 = vst [vmem:[#allocation2 + $0x1f0] sm:$0xff] %v1255
        %1320 = vst [vmem:[#allocation2 + $0x1f8] sm:$0xff] %v1256
        // Predicated region
        $region53: #{tpu_custom_call.1} parent=35 // pred_check
          %p1321 = pneg %p321
        $region54: #{tpu_custom_call.1} parent=35 // pred_check_branch
          %1323 = sbr.rel (%p1321) target = $region56
        $region55: #{tpu_custom_call.1} parent=35 // pred_region
          %v1324 = vld [vmem:[#allocation2] sm:$0xff]
          %v1325 = vld [vmem:[#allocation2 + $0x8] sm:$0xff]
          %v1326 = vld [vmem:[#allocation2 + $0x10] sm:$0xff]
          %v1327 = vld [vmem:[#allocation2 + $0x18] sm:$0xff]
          %v1328 = vld [vmem:[#allocation2 + $0x20] sm:$0xff]
          %v1329 = vld [vmem:[#allocation2 + $0x28] sm:$0xff]
          %v1330 = vld [vmem:[#allocation2 + $0x30] sm:$0xff]
          %v1331 = vld [vmem:[#allocation2 + $0x38] sm:$0xff]
          %v1332 = vld [vmem:[#allocation2 + $0x40] sm:$0xff]
          %v1333 = vld [vmem:[#allocation2 + $0x48] sm:$0xff]
          %v1334 = vld [vmem:[#allocation2 + $0x50] sm:$0xff]
          %v1335 = vld [vmem:[#allocation2 + $0x58] sm:$0xff]
          %v1336 = vld [vmem:[#allocation2 + $0x60] sm:$0xff]
          %v1337 = vld [vmem:[#allocation2 + $0x68] sm:$0xff]
          %v1338 = vld [vmem:[#allocation2 + $0x70] sm:$0xff]
          %v1339 = vld [vmem:[#allocation2 + $0x78] sm:$0xff]
          %v1340 = vld [vmem:[#allocation2 + $0x80] sm:$0xff]
          %v1341 = vld [vmem:[#allocation2 + $0x88] sm:$0xff]
          %v1342 = vld [vmem:[#allocation2 + $0x90] sm:$0xff]
          %v1343 = vld [vmem:[#allocation2 + $0x98] sm:$0xff]
          %v1344 = vld [vmem:[#allocation2 + $0xa0] sm:$0xff]
          %v1345 = vld [vmem:[#allocation2 + $0xa8] sm:$0xff]
          %v1346 = vld [vmem:[#allocation2 + $0xb0] sm:$0xff]
          %v1347 = vld [vmem:[#allocation2 + $0xb8] sm:$0xff]
          %v1348 = vld [vmem:[#allocation2 + $0xc0] sm:$0xff]
          %v1349 = vld [vmem:[#allocation2 + $0xc8] sm:$0xff]
          %v1350 = vld [vmem:[#allocation2 + $0xd0] sm:$0xff]
          %v1351 = vld [vmem:[#allocation2 + $0xd8] sm:$0xff]
          %v1352 = vld [vmem:[#allocation2 + $0xe0] sm:$0xff]
          %v1353 = vld [vmem:[#allocation2 + $0xe8] sm:$0xff]
          %v1354 = vld [vmem:[#allocation2 + $0xf0] sm:$0xff]
          %v1355 = vld [vmem:[#allocation2 + $0xf8] sm:$0xff]
          %v1356 = vld [vmem:[#allocation2 + $0x100] sm:$0xff]
          %v1357 = vld [vmem:[#allocation2 + $0x108] sm:$0xff]
          %v1358 = vld [vmem:[#allocation2 + $0x110] sm:$0xff]
          %v1359 = vld [vmem:[#allocation2 + $0x118] sm:$0xff]
          %v1360 = vld [vmem:[#allocation2 + $0x120] sm:$0xff]
          %v1361 = vld [vmem:[#allocation2 + $0x128] sm:$0xff]
          %v1362 = vld [vmem:[#allocation2 + $0x130] sm:$0xff]
          %v1363 = vld [vmem:[#allocation2 + $0x138] sm:$0xff]
          %v1364 = vld [vmem:[#allocation2 + $0x140] sm:$0xff]
          %v1365 = vld [vmem:[#allocation2 + $0x148] sm:$0xff]
          %v1366 = vld [vmem:[#allocation2 + $0x150] sm:$0xff]
          %v1367 = vld [vmem:[#allocation2 + $0x158] sm:$0xff]
          %v1368 = vld [vmem:[#allocation2 + $0x160] sm:$0xff]
          %v1369 = vld [vmem:[#allocation2 + $0x168] sm:$0xff]
          %v1370 = vld [vmem:[#allocation2 + $0x170] sm:$0xff]
          %v1371 = vld [vmem:[#allocation2 + $0x178] sm:$0xff]
          %v1372 = vld [vmem:[#allocation2 + $0x180] sm:$0xff]
          %v1373 = vld [vmem:[#allocation2 + $0x188] sm:$0xff]
          %v1374 = vld [vmem:[#allocation2 + $0x190] sm:$0xff]
          %v1375 = vld [vmem:[#allocation2 + $0x198] sm:$0xff]
          %v1376 = vld [vmem:[#allocation2 + $0x1a0] sm:$0xff]
          %v1377 = vld [vmem:[#allocation2 + $0x1a8] sm:$0xff]
          %v1378 = vld [vmem:[#allocation2 + $0x1b0] sm:$0xff]
          %v1379 = vld [vmem:[#allocation2 + $0x1b8] sm:$0xff]
          %v1380 = vld [vmem:[#allocation2 + $0x1c0] sm:$0xff]
          %v1381 = vld [vmem:[#allocation2 + $0x1c8] sm:$0xff]
          %v1382 = vld [vmem:[#allocation2 + $0x1d0] sm:$0xff]
          %v1383 = vld [vmem:[#allocation2 + $0x1d8] sm:$0xff]
          %v1384 = vld [vmem:[#allocation2 + $0x1e0] sm:$0xff]
          %v1385 = vld [vmem:[#allocation2 + $0x1e8] sm:$0xff]
          %v1386 = vld [vmem:[#allocation2 + $0x1f0] sm:$0xff]
          %v1387 = vld [vmem:[#allocation2 + $0x1f8] sm:$0xff]
          %v1388 = vld [vmem:[#allocation8] sm:$0x3]
          %v1390 = vperm.slane %v1388, 0
          %v1391 = vperm.slane %v1388, 1
          %v1394 = vmul.f32 %v1324, %v1390
          %v1395 = vmul.f32 %v1325, %v1391
          %v1396 = vmul.f32 %v1326, %v1390
          %v1397 = vmul.f32 %v1327, %v1391
          %v1398 = vmul.f32 %v1328, %v1390
          %v1399 = vmul.f32 %v1329, %v1391
          %v1400 = vmul.f32 %v1330, %v1390
          %v1401 = vmul.f32 %v1331, %v1391
          %v1402 = vmul.f32 %v1332, %v1390
          %v1403 = vmul.f32 %v1333, %v1391
          %v1404 = vmul.f32 %v1334, %v1390
          %v1405 = vmul.f32 %v1335, %v1391
          %v1406 = vmul.f32 %v1336, %v1390
          %v1407 = vmul.f32 %v1337, %v1391
          %v1408 = vmul.f32 %v1338, %v1390
          %v1409 = vmul.f32 %v1339, %v1391
          %v1410 = vmul.f32 %v1340, %v1390
          %v1411 = vmul.f32 %v1341, %v1391
          %v1412 = vmul.f32 %v1342, %v1390
          %v1413 = vmul.f32 %v1343, %v1391
          %v1414 = vmul.f32 %v1344, %v1390
          %v1415 = vmul.f32 %v1345, %v1391
          %v1416 = vmul.f32 %v1346, %v1390
          %v1417 = vmul.f32 %v1347, %v1391
          %v1418 = vmul.f32 %v1348, %v1390
          %v1419 = vmul.f32 %v1349, %v1391
          %v1420 = vmul.f32 %v1350, %v1390
          %v1421 = vmul.f32 %v1351, %v1391
          %v1422 = vmul.f32 %v1352, %v1390
          %v1423 = vmul.f32 %v1353, %v1391
          %v1424 = vmul.f32 %v1354, %v1390
          %v1425 = vmul.f32 %v1355, %v1391
          %v1426 = vmul.f32 %v1356, %v1390
          %v1427 = vmul.f32 %v1357, %v1391
          %v1428 = vmul.f32 %v1358, %v1390
          %v1429 = vmul.f32 %v1359, %v1391
          %v1430 = vmul.f32 %v1360, %v1390
          %v1431 = vmul.f32 %v1361, %v1391
          %v1432 = vmul.f32 %v1362, %v1390
          %v1433 = vmul.f32 %v1363, %v1391
          %v1434 = vmul.f32 %v1364, %v1390
          %v1435 = vmul.f32 %v1365, %v1391
          %v1436 = vmul.f32 %v1366, %v1390
          %v1437 = vmul.f32 %v1367, %v1391
          %v1438 = vmul.f32 %v1368, %v1390
          %v1439 = vmul.f32 %v1369, %v1391
          %v1440 = vmul.f32 %v1370, %v1390
          %v1441 = vmul.f32 %v1371, %v1391
          %v1442 = vmul.f32 %v1372, %v1390
          %v1443 = vmul.f32 %v1373, %v1391
          %v1444 = vmul.f32 %v1374, %v1390
          %v1445 = vmul.f32 %v1375, %v1391
          %v1446 = vmul.f32 %v1376, %v1390
          %v1447 = vmul.f32 %v1377, %v1391
          %v1448 = vmul.f32 %v1378, %v1390
          %v1449 = vmul.f32 %v1379, %v1391
          %v1450 = vmul.f32 %v1380, %v1390
          %v1451 = vmul.f32 %v1381, %v1391
          %v1452 = vmul.f32 %v1382, %v1390
          %v1453 = vmul.f32 %v1383, %v1391
          %v1454 = vmul.f32 %v1384, %v1390
          %v1455 = vmul.f32 %v1385, %v1391
          %v1456 = vmul.f32 %v1386, %v1390
          %v1457 = vmul.f32 %v1387, %v1391
          %v1458 = vld [vmem:[%s317] sm:$0x3]
          %v1460 = vperm.slane %v1458, 0
          %v1461 = vperm.slane %v1458, 1
          %v1464 = vadd.f32 %v1394, %v1460
          %v1465 = vadd.f32 %v1395, %v1461
          %v1466 = vadd.f32 %v1396, %v1460
          %v1467 = vadd.f32 %v1397, %v1461
          %v1468 = vadd.f32 %v1398, %v1460
          %v1469 = vadd.f32 %v1399, %v1461
          %v1470 = vadd.f32 %v1400, %v1460
          %v1471 = vadd.f32 %v1401, %v1461
          %v1472 = vadd.f32 %v1402, %v1460
          %v1473 = vadd.f32 %v1403, %v1461
          %v1474 = vadd.f32 %v1404, %v1460
          %v1475 = vadd.f32 %v1405, %v1461
          %v1476 = vadd.f32 %v1406, %v1460
          %v1477 = vadd.f32 %v1407, %v1461
          %v1478 = vadd.f32 %v1408, %v1460
          %v1479 = vadd.f32 %v1409, %v1461
          %v1480 = vadd.f32 %v1410, %v1460
          %v1481 = vadd.f32 %v1411, %v1461
          %v1482 = vadd.f32 %v1412, %v1460
          %v1483 = vadd.f32 %v1413, %v1461
          %v1484 = vadd.f32 %v1414, %v1460
          %v1485 = vadd.f32 %v1415, %v1461
          %v1486 = vadd.f32 %v1416, %v1460
          %v1487 = vadd.f32 %v1417, %v1461
          %v1488 = vadd.f32 %v1418, %v1460
          %v1489 = vadd.f32 %v1419, %v1461
          %v1490 = vadd.f32 %v1420, %v1460
          %v1491 = vadd.f32 %v1421, %v1461
          %v1492 = vadd.f32 %v1422, %v1460
          %v1493 = vadd.f32 %v1423, %v1461
          %v1494 = vadd.f32 %v1424, %v1460
          %v1495 = vadd.f32 %v1425, %v1461
          %v1496 = vadd.f32 %v1426, %v1460
          %v1497 = vadd.f32 %v1427, %v1461
          %v1498 = vadd.f32 %v1428, %v1460
          %v1499 = vadd.f32 %v1429, %v1461
          %v1500 = vadd.f32 %v1430, %v1460
          %v1501 = vadd.f32 %v1431, %v1461
          %v1502 = vadd.f32 %v1432, %v1460
          %v1503 = vadd.f32 %v1433, %v1461
          %v1504 = vadd.f32 %v1434, %v1460
          %v1505 = vadd.f32 %v1435, %v1461
          %v1506 = vadd.f32 %v1436, %v1460
          %v1507 = vadd.f32 %v1437, %v1461
          %v1508 = vadd.f32 %v1438, %v1460
          %v1509 = vadd.f32 %v1439, %v1461
          %v1510 = vadd.f32 %v1440, %v1460
          %v1511 = vadd.f32 %v1441, %v1461
          %v1512 = vadd.f32 %v1442, %v1460
          %v1513 = vadd.f32 %v1443, %v1461
          %v1514 = vadd.f32 %v1444, %v1460
          %v1515 = vadd.f32 %v1445, %v1461
          %v1516 = vadd.f32 %v1446, %v1460
          %v1517 = vadd.f32 %v1447, %v1461
          %v1518 = vadd.f32 %v1448, %v1460
          %v1519 = vadd.f32 %v1449, %v1461
          %v1520 = vadd.f32 %v1450, %v1460
          %v1521 = vadd.f32 %v1451, %v1461
          %v1522 = vadd.f32 %v1452, %v1460
          %v1523 = vadd.f32 %v1453, %v1461
          %v1524 = vadd.f32 %v1454, %v1460
          %v1525 = vadd.f32 %v1455, %v1461
          %v1526 = vadd.f32 %v1456, %v1460
          %v1527 = vadd.f32 %v1457, %v1461
          %v1528 = vmax.f32 %v1464, 0.0
          %v1529 = vmax.f32 %v1465, 0.0
          %v1530 = vmax.f32 %v1466, 0.0
          %v1531 = vmax.f32 %v1467, 0.0
          %v1532 = vmax.f32 %v1468, 0.0
          %v1533 = vmax.f32 %v1469, 0.0
          %v1534 = vmax.f32 %v1470, 0.0
          %v1535 = vmax.f32 %v1471, 0.0
          %v1536 = vmax.f32 %v1472, 0.0
          %v1537 = vmax.f32 %v1473, 0.0
          %v1538 = vmax.f32 %v1474, 0.0
          %v1539 = vmax.f32 %v1475, 0.0
          %v1540 = vmax.f32 %v1476, 0.0
          %v1541 = vmax.f32 %v1477, 0.0
          %v1542 = vmax.f32 %v1478, 0.0
          %v1543 = vmax.f32 %v1479, 0.0
          %v1544 = vmax.f32 %v1480, 0.0
          %v1545 = vmax.f32 %v1481, 0.0
          %v1546 = vmax.f32 %v1482, 0.0
          %v1547 = vmax.f32 %v1483, 0.0
          %v1548 = vmax.f32 %v1484, 0.0
          %v1549 = vmax.f32 %v1485, 0.0
          %v1550 = vmax.f32 %v1486, 0.0
          %v1551 = vmax.f32 %v1487, 0.0
          %v1552 = vmax.f32 %v1488, 0.0
          %v1553 = vmax.f32 %v1489, 0.0
          %v1554 = vmax.f32 %v1490, 0.0
          %v1555 = vmax.f32 %v1491, 0.0
          %v1556 = vmax.f32 %v1492, 0.0
          %v1557 = vmax.f32 %v1493, 0.0
          %v1558 = vmax.f32 %v1494, 0.0
          %v1559 = vmax.f32 %v1495, 0.0
          %v1560 = vmax.f32 %v1496, 0.0
          %v1561 = vmax.f32 %v1497, 0.0
          %v1562 = vmax.f32 %v1498, 0.0
          %v1563 = vmax.f32 %v1499, 0.0
          %v1564 = vmax.f32 %v1500, 0.0
          %v1565 = vmax.f32 %v1501, 0.0
          %v1566 = vmax.f32 %v1502, 0.0
          %v1567 = vmax.f32 %v1503, 0.0
          %v1568 = vmax.f32 %v1504, 0.0
          %v1569 = vmax.f32 %v1505, 0.0
          %v1570 = vmax.f32 %v1506, 0.0
          %v1571 = vmax.f32 %v1507, 0.0
          %v1572 = vmax.f32 %v1508, 0.0
          %v1573 = vmax.f32 %v1509, 0.0
          %v1574 = vmax.f32 %v1510, 0.0
          %v1575 = vmax.f32 %v1511, 0.0
          %v1576 = vmax.f32 %v1512, 0.0
          %v1577 = vmax.f32 %v1513, 0.0
          %v1578 = vmax.f32 %v1514, 0.0
          %v1579 = vmax.f32 %v1515, 0.0
          %v1580 = vmax.f32 %v1516, 0.0
          %v1581 = vmax.f32 %v1517, 0.0
          %v1582 = vmax.f32 %v1518, 0.0
          %v1583 = vmax.f32 %v1519, 0.0
          %v1584 = vmax.f32 %v1520, 0.0
          %v1585 = vmax.f32 %v1521, 0.0
          %v1586 = vmax.f32 %v1522, 0.0
          %v1587 = vmax.f32 %v1523, 0.0
          %v1588 = vmax.f32 %v1524, 0.0
          %v1589 = vmax.f32 %v1525, 0.0
          %v1590 = vmax.f32 %v1526, 0.0
          %v1591 = vmax.f32 %v1527, 0.0
          %v1592 = vpack.c.bf16 %v1529, %v1528
          %v1593 = vpack.c.bf16 %v1531, %v1530
          %v1594 = vpack.c.bf16 %v1533, %v1532
          %v1595 = vpack.c.bf16 %v1535, %v1534
          %v1596 = vpack.c.bf16 %v1537, %v1536
          %v1597 = vpack.c.bf16 %v1539, %v1538
          %v1598 = vpack.c.bf16 %v1541, %v1540
          %v1599 = vpack.c.bf16 %v1543, %v1542
          %v1600 = vpack.c.bf16 %v1545, %v1544
          %v1601 = vpack.c.bf16 %v1547, %v1546
          %v1602 = vpack.c.bf16 %v1549, %v1548
          %v1603 = vpack.c.bf16 %v1551, %v1550
          %v1604 = vpack.c.bf16 %v1553, %v1552
          %v1605 = vpack.c.bf16 %v1555, %v1554
          %v1606 = vpack.c.bf16 %v1557, %v1556
          %v1607 = vpack.c.bf16 %v1559, %v1558
          %v1608 = vpack.c.bf16 %v1561, %v1560
          %v1609 = vpack.c.bf16 %v1563, %v1562
          %v1610 = vpack.c.bf16 %v1565, %v1564
          %v1611 = vpack.c.bf16 %v1567, %v1566
          %v1612 = vpack.c.bf16 %v1569, %v1568
          %v1613 = vpack.c.bf16 %v1571, %v1570
          %v1614 = vpack.c.bf16 %v1573, %v1572
          %v1615 = vpack.c.bf16 %v1575, %v1574
          %v1616 = vpack.c.bf16 %v1577, %v1576
          %v1617 = vpack.c.bf16 %v1579, %v1578
          %v1618 = vpack.c.bf16 %v1581, %v1580
          %v1619 = vpack.c.bf16 %v1583, %v1582
          %v1620 = vpack.c.bf16 %v1585, %v1584
          %v1621 = vpack.c.bf16 %v1587, %v1586
          %v1622 = vpack.c.bf16 %v1589, %v1588
          %v1623 = vpack.c.bf16 %v1591, %v1590
          %1624 = vst [vmem:[%s308] sm:$0xff] %v1592
          %1625 = vst [vmem:[%s308 + $0x8] sm:$0xff] %v1593
          %1626 = vst [vmem:[%s308 + $0x10] sm:$0xff] %v1594
          %1627 = vst [vmem:[%s308 + $0x18] sm:$0xff] %v1595
          %1628 = vst [vmem:[%s308 + $0x20] sm:$0xff] %v1596
          %1629 = vst [vmem:[%s308 + $0x28] sm:$0xff] %v1597
          %1630 = vst [vmem:[%s308 + $0x30] sm:$0xff] %v1598
          %1631 = vst [vmem:[%s308 + $0x38] sm:$0xff] %v1599
          %1632 = vst [vmem:[%s308 + $0x40] sm:$0xff] %v1600
          %1633 = vst [vmem:[%s308 + $0x48] sm:$0xff] %v1601
          %1634 = vst [vmem:[%s308 + $0x50] sm:$0xff] %v1602
          %1635 = vst [vmem:[%s308 + $0x58] sm:$0xff] %v1603
          %1636 = vst [vmem:[%s308 + $0x60] sm:$0xff] %v1604
          %1637 = vst [vmem:[%s308 + $0x68] sm:$0xff] %v1605
          %1638 = vst [vmem:[%s308 + $0x70] sm:$0xff] %v1606
          %1639 = vst [vmem:[%s308 + $0x78] sm:$0xff] %v1607
          %1640 = vst [vmem:[%s308 + $0x80] sm:$0xff] %v1608
          %1641 = vst [vmem:[%s308 + $0x88] sm:$0xff] %v1609
          %1642 = vst [vmem:[%s308 + $0x90] sm:$0xff] %v1610
          %1643 = vst [vmem:[%s308 + $0x98] sm:$0xff] %v1611
          %1644 = vst [vmem:[%s308 + $0xa0] sm:$0xff] %v1612
          %1645 = vst [vmem:[%s308 + $0xa8] sm:$0xff] %v1613
          %1646 = vst [vmem:[%s308 + $0xb0] sm:$0xff] %v1614
          %1647 = vst [vmem:[%s308 + $0xb8] sm:$0xff] %v1615
          %1648 = vst [vmem:[%s308 + $0xc0] sm:$0xff] %v1616
          %1649 = vst [vmem:[%s308 + $0xc8] sm:$0xff] %v1617
          %1650 = vst [vmem:[%s308 + $0xd0] sm:$0xff] %v1618
          %1651 = vst [vmem:[%s308 + $0xd8] sm:$0xff] %v1619
          %1652 = vst [vmem:[%s308 + $0xe0] sm:$0xff] %v1620
          %1653 = vst [vmem:[%s308 + $0xe8] sm:$0xff] %v1621
          %1654 = vst [vmem:[%s308 + $0xf0] sm:$0xff] %v1622
          %1655 = vst [vmem:[%s308 + $0xf8] sm:$0xff] %v1623
        $region56: #{tpu_custom_call.1} parent=35 // pred_fallthru
          _
        %s1656 = sand.u32 %s159, 1
        %s1657 = scalar_lea.sflag [#allocation5], %s1656
        %s1658 = sand.u32 %s159, 1
        %s1659 = smul.addr %s1658, 256
        %s1660 = scalar_lea.vmem [#allocation9], %s1659
        // Predicated region
        $region57: #{tpu_custom_call.1} parent=35 // pred_check
          %p1661 = pneg %p169
        $region58: #{tpu_custom_call.1} parent=35 // pred_check_branch
          %1663 = sbr.rel (%p1661) target = $region60
        $region59: #{tpu_custom_call.1} parent=35 // pred_region
          %s1664 = smul.u32 32, %s27
          %s1665 = smul.u32 2, %s28
          %1667 = vsyncadd %s1657, 0
          %s1668 = smul.addr %s1664, 2
          %s1669 = sadd.s32 %s1665, %s1668
          %s1670 = smul.addr %s1669, 4
          %s1671 = scalar_lea.hbm %s4, %s1670
          %s1672 = sshll.u32 %s1660, 4
          %s1673 = int_to_ptr.vmem [resolvable:$true] %s1672
          %s1674 = sshll.u32 %s1671, 4
          %s1675 = int_to_ptr.hbm [resolvable:$true] %s1674
          %1680 = dma.vmem_to_hbm [thread:$0]  %s1673, 4096, %s1675, %s1657, 128, 128, 8
        $region60: #{tpu_custom_call.1} parent=35 // pred_fallthru
          _
      $region36: #{tpu_custom_call.1} parent=5 // pred_fallthru
        _
      %p1681 = scmp.le.s32.totalorder 2, %s17
      // Predicated region
      $region61: #{tpu_custom_call.1} parent=5 // pred_check
        %p1682 = pneg %p1681
      $region62: #{tpu_custom_call.1} parent=5 // pred_check_branch
        %1684 = sbr.rel (%p1682) target = $region64
      $region63: #{tpu_custom_call.1} parent=5 // pred_region
        %s1685 = ssub.s32 %s17, 2
        // Predicated region
        $region65: #{tpu_custom_call.1} parent=63 // pred_check
          %p1686 = pneg %p175
        $region66: #{tpu_custom_call.1} parent=63 // pred_check_branch
          %1688 = sbr.rel (%p1686) target = $region68
        $region67: #{tpu_custom_call.1} parent=63 // pred_region
          %s1689 = sand.u32 %s160, 1
          %s1690 = scalar_lea.sflag [#allocation5], %s1689
          %s1691 = sand.u32 %s160, 1
          %s1692 = smul.addr %s1691, 256
          %s1693 = scalar_lea.vmem [#allocation9], %s1692
          %1695 = dma.done %s1690, 4096
        $region68: #{tpu_custom_call.1} parent=63 // pred_fallthru
          _
      $region64: #{tpu_custom_call.1} parent=5 // pred_fallthru
        _
    $region6: #{tpu_custom_call.1} parent=1 // loop_footer
      %s21 = sadd.s32 1, %s17
    $region7: #{tpu_custom_call.1} parent=1 // loop_footer_branch
      %16 = sbr.rel target = $region3
    $region8: #{tpu_custom_call.1} parent=1 // loop_exit
      _
    %1696 = vsyncpa [#allocation4], 1
    %s1697 = scalar_lea.sflag [#allocation4], 1
    %1698 = vsyncpa %s1697, 1
    %1699 = vsyncpa [#allocation7], 1
    %1700 = vsyncpa [#allocation5], 1
    %s1701 = scalar_lea.sflag [#allocation5], 1
    %1702 = vsyncpa %s1701, 1

</llo_original>
